<compile_context>
chip_gen: v6e
topology: v6e:2x2x1
jax: 0.10.0
libtpu: 0.0.40
codegen_flags: <defaults>
</compile_context>

<pallas_src>
import functools

import numpy as np
import jax
import jax.numpy as jnp
from jax import lax
from jax.experimental import pallas as pl
from jax.experimental.pallas import tpu as pltpu

BN_EPS = 1e-5
MXU_DTYPE = jnp.bfloat16      # MXU operand dtype; accumulation is always f32.
ACT_DTYPE = MXU_DTYPE         # inter-kernel activation dtype in HBM.

_CP = pltpu.CompilerParams(dimension_semantics=("parallel",))


# ----------------------------- host-side helpers ------------------------------

def _round_up(v, m):
    return (v + m - 1) // m * m


def _tap_offsets():
    return [(dh, dw) for dh in (-1, 0, 1) for dw in (-1, 0, 1)]


def tap_shifts(W):
    # jnp.roll shift such that rolled[:, m] == x[:, m + dh*W + dw]
    return tuple(-(dh * W + dw) for dh, dw in _tap_offsets())


@functools.lru_cache(maxsize=None)
def tap_masks(H, W):
    # mask[t, 0, h*W + w] == 1.0 iff source pixel (h+dh, w+dw) lies inside the image
    m = np.zeros((9, 1, H * W), np.float32)
    hh, ww = np.meshgrid(np.arange(H), np.arange(W), indexing="ij")
    for t, (dh, dw) in enumerate(_tap_offsets()):
        ok = (hh + dh >= 0) & (hh + dh < H) & (ww + dw >= 0) & (ww + dw < W)
        m[t, 0] = ok.reshape(-1).astype(np.float32)
    return jnp.asarray(m)


def make_sel_matrix(H, W, sh, sw):
    # 0/1 matrix S with (x @ S)[:, oh*Wo+ow] == x[:, (oh*sh)*W + ow*sw]
    # (exact picks in bf16), i.e. the ::sh,::sw spatial subsample done on the MXU.
    Ho, Wo = -(-H // sh), -(-W // sw)
    P = np.zeros((H * W, Ho * Wo), np.float32)
    for oh in range(Ho):
        for ow in range(Wo):
            P[(oh * sh) * W + ow * sw, oh * Wo + ow] = 1.0
    return jnp.asarray(P, MXU_DTYPE), Ho, Wo


def make_pool_matrix(H, W, kh, kw):
    # F.avg_pool2d(x, (kh,kw)): stride=(kh,kw), no padding -> small averaging matrix.
    ho, wo = (H - kh) // kh + 1, (W - kw) // kw + 1
    P = np.zeros((H * W, ho * wo), np.float32)
    for oh in range(ho):
        for ow in range(wo):
            for dh in range(kh):
                for dw in range(kw):
                    P[(oh * kh + dh) * W + (ow * kw + dw), oh * wo + ow] = 1.0 / (kh * kw)
    return jnp.asarray(P), ho, wo


# ----------------------------- in-kernel helpers ------------------------------

def _masked_tap(x, shift, mask):
    # x: (C, M), mask: (1, M) of 0/1.  Lane roll + zero the wrapped taps.
    if shift == 0:            # centre tap is always in-bounds
        return x
    return jnp.roll(x, shift, axis=1) * mask


def _tap_stack(h, shifts, masks):
    # (C, M) -> (9*C, M): all 9 taps stacked on the contraction axis so ONE MXU
    # matmul (K = 9*C) consumes the whole 3x3 receptive field.
    return jnp.concatenate(
        [_masked_tap(h, shifts[t], masks[t]) for t in range(9)], axis=0)


# ----------------------------- Pallas kernels ------------------------------

def _make_stem_kernel(num_convs, shifts_full, shifts_sub):
    # Fused stem: conv0 (3x3, stride 2,2, ReLU) -> in-kernel subsample -> remaining
    # 3x3 stride-1 convs, all in VMEM; only the final activation goes to HBM (bf16).
    def kernel(x_ref, *refs):
        refs = list(refs)
        o_ref = refs.pop()
        it = iter(refs)
        w0, b0 = next(it)[...], next(it)[...]
        mask_full = next(it)
        sel = next(it)[...]

        x = x_ref[0].astype(jnp.float32)                         # (Cin_pad, M)
        mf = [mask_full[t] for t in range(9)]
        taps = _tap_stack(x, shifts_full, mf).astype(w0.dtype)
        h = jnp.maximum(
            jnp.dot(w0, taps, preferred_element_type=jnp.float32) + b0, 0.0)
        # stride-(2,2) folded in: exact 0/1 lane-selection matmul (bf16 operands).
        h = jnp.dot(h.astype(sel.dtype), sel, preferred_element_type=jnp.float32)

        if num_convs > 1:
            mask_sub = next(it)
            ms = [mask_sub[t] for t in range(9)]
            for _ in range(num_convs - 1):
                w, b = next(it)[...], next(it)[...]
                taps = _tap_stack(h, shifts_sub, ms).astype(w.dtype)
                h = jnp.maximum(
                    jnp.dot(w, taps, preferred_element_type=jnp.float32) + b, 0.0)
        o_ref[0] = h.astype(o_ref.dtype)
    return kernel


def _make_stage_kernel(cfg):
    # Fused HG stage: [depthwise 3x3 downsample + subsample] -> block_num x
    # (layer convs -> VMEM concat scratch -> ONE aggregation matmul -> ESE (+id))
    # [-> fused avg_pool].  No intermediate ever leaves VMEM.
    has_down, has_pool = cfg["has_down"], cfg["has_pool"]
    shifts_pre, shifts_blk = cfg["shifts_pre"], cfg["shifts_blk"]
    blocks = cfg["blocks"]

    def kernel(x_ref, *refs):
        refs = list(refs)
        cat_scr = refs.pop()                       # VMEM (max_total, Md) f32 scratch
        o_ref = refs.pop()
        it = iter(refs)

        if has_down:
            dw_w, dw_b = next(it)[...], next(it)[...]
            mask_pre = next(it)
            sel = next(it)[...]
            xf = x_ref[0].astype(jnp.float32)
            acc = jnp.zeros(xf.shape, jnp.float32)
            for t in range(9):                     # depthwise 3x3: pure VPU, f32
                acc = acc + dw_w[t] * _masked_tap(xf, shifts_pre[t], mask_pre[t])
            acc = acc + dw_b
            # strided downsample folded in: exact lane-selection matmul.
            cur = jnp.dot(acc.astype(sel.dtype), sel,
                          preferred_element_type=jnp.float32)
        else:
            cur = x_ref[0].astype(jnp.float32)

        mask_blk = next(it)
        mb = [mask_blk[t] for t in range(9)]

        for blk in blocks:
            layer_num = blk["layer_num"]
            cin, mid, total = blk["cin"], blk["mid"], blk["total"]
            lw, lb = [], []
            for _ in range(layer_num):
                lw.append(next(it)[...])
                lb.append(next(it)[...])
            w_agg, b_agg = next(it)[...], next(it)[...]
            w_att, b_att = next(it)[...], next(it)[...]

            # Channel concat is materialized incrementally in the VMEM scratch.
            cat_scr[0:cin, :] = cur
            h = cur
            for l in range(layer_num):
                taps = _tap_stack(h, shifts_blk, mb).astype(lw[l].dtype)
                h = jnp.maximum(
                    jnp.dot(lw[l], taps, preferred_element_type=jnp.float32)
                    + lb[l], 0.0)
                cat_scr[cin + l * mid: cin + (l + 1) * mid, :] = h

            # 1x1 aggregation: ONE large-K matmul over the whole concat slab.
            slab = cat_scr[0:total, :].astype(w_agg.dtype)
            agg = jnp.maximum(
                jnp.dot(w_agg, slab, preferred_element_type=jnp.float32) + b_agg, 0.0)

            # ESE attention: global mean -> 1x1 (bf16 MXU) -> sigmoid -> scale.
            pooled = jnp.mean(agg, axis=1, keepdims=True)          # (Cout, 1) f32
            s = jax.nn.sigmoid(
                jnp.dot(w_att, pooled.astype(w_att.dtype),
                        preferred_element_type=jnp.float32) + b_att)
            out = agg * s
            if blk["identity"]:
                out = out + cur
            cur = out

        if has_pool:
            pool = next(it)[...]                   # (Md, Mo) f32 averaging matrix
            o_ref[0] = jnp.dot(cur, pool, preferred_element_type=jnp.float32)
        else:
            o_ref[0] = cur.astype(o_ref.dtype)
    return kernel


# ----------------------------- weight prep (BN folding, layouts) ------------------------------

def fold_bn(p):
    scale = p["gamma"] / jnp.sqrt(p["var"] + BN_EPS)
    w = p["w"] * scale[:, None, None, None]
    b = p["beta"] - p["mean"] * scale
    return w, b


def prep_dense3x3_flat(p, cin_pad=None):
    w, b = fold_bn(p)                                # (Cout, Cin, 3, 3)
    cout, cin = int(w.shape[0]), int(w.shape[1])
    if cin_pad is not None and cin_pad > cin:        # pad Cin (e.g. 3 -> 8) so the
        w = jnp.pad(w, ((0, 0), (0, cin_pad - cin), (0, 0), (0, 0)))
        cin = cin_pad                                # tap stack stays sublane-aligned
    # tap-major flatten: w_flat[:, t*Cin:(t+1)*Cin] = w[:, :, kh, kw],  t = kh*3+kw
    w_flat = jnp.transpose(w, (0, 2, 3, 1)).reshape(cout, 9 * cin).astype(MXU_DTYPE)
    return w_flat, b.reshape(cout, 1).astype(jnp.float32)


def prep_dw3x3(p):
    w, b = fold_bn(p)                                # (C, 1, 3, 3)
    c = int(w.shape[0])
    w9 = jnp.transpose(w[:, 0], (1, 2, 0)).reshape(9, c, 1).astype(jnp.float32)
    return w9, b.reshape(c, 1).astype(jnp.float32)


def prep_conv1x1(p):
    w, b = fold_bn(p)                                # (Cout, Ctot, 1, 1)
    return w[:, :, 0, 0].astype(MXU_DTYPE), b.reshape(-1, 1).astype(jnp.float32)


def prepare_backbone(params, in_shape):
    """One-time prep: BN folding, tap-major weight flatten, bf16 casts, selection /
    pool / mask tables and the per-stage fused kernels (hoisted out of forward)."""
    _, in_ch, H, W = in_shape
    prep = {}
    cin_pad = _round_up(int(in_ch), 8)
    prep["cin_pad"] = cin_pad

    # ---- stem (one fused kernel) ----
    stem_ps = params["stem"]
    w0, b0 = prep_dense3x3_flat(stem_ps[0]["p"], cin_pad=cin_pad)
    sh, sw = stem_ps[0]["stride"]
    sel0, Hs, Ws = make_sel_matrix(H, W, sh, sw)
    convs = [prep_dense3x3_flat(s["p"]) for s in stem_ps[1:]]      # stride-1 convs
    prep["stem"] = dict(
        w0=w0, b0=b0, mask_full=tap_masks(H, W), sel=sel0,
        mask_sub=tap_masks(Hs, Ws), convs=convs,
        Cout=int(stem_ps[-1]["p"]["w"].shape[0]), Ms=Hs * Ws,
        kernel=_make_stem_kernel(len(stem_ps), tap_shifts(W), tap_shifts(Ws)),
    )
    H, W = Hs, Ws

    # ---- stages (one fused kernel per stage; pool fused into the last one) ----
    stages = []
    n_stages = len(params["stages"])
    for si, st in enumerate(params["stages"]):
        stg = {}
        has_down = st["downsample"] is not None
        stg["has_down"] = has_down
        if has_down:
            dw_w, dw_b = prep_dw3x3(st["downsample"]["p"])
            dsh, dsw = st["downsample"]["stride"]
            sel, Hd, Wd = make_sel_matrix(H, W, dsh, dsw)
            stg.update(dw_w=dw_w, dw_b=dw_b, mask_pre=tap_masks(H, W), sel=sel)
            shifts_pre = tap_shifts(W)
        else:
            Hd, Wd = H, W
            shifts_pre = None
        stg["mask_blk"] = tap_masks(Hd, Wd)
        Md = Hd * Wd

        blocks_prep, blocks_cfg, max_total = [], [], 0
        for blk in st["blocks"]:
            layers = [prep_dense3x3_flat(lp) for lp in blk["layers"]]
            w_agg, b_agg = prep_conv1x1(blk["agg"])               # (Cout, total) full
            w_att = blk["att"]["w"][:, :, 0, 0].astype(MXU_DTYPE)
            b_att = blk["att"]["b"].reshape(-1, 1).astype(jnp.float32)
            cin = int(blk["layers"][0]["w"].shape[1])
            mid = int(blk["layers"][0]["w"].shape[0])
            total = int(blk["agg"]["w"].shape[1])
            cout = int(blk["agg"]["w"].shape[0])
            max_total = max(max_total, total)
            blocks_prep.append(dict(layers=layers, w_agg=w_agg, b_agg=b_agg,
                                    w_att=w_att, b_att=b_att))
            blocks_cfg.append(dict(layer_num=len(layers), cin=cin, mid=mid,
                                   total=total, cout=cout,
                                   identity=blk["identity"]))

        has_pool = (si == n_stages - 1)          # eval branch: F.avg_pool2d(x, [3,2])
        if has_pool:
            pool, ho, wo = make_pool_matrix(Hd, Wd, 3, 2)
            stg.update(pool=pool, Mo=ho * wo, pool_hw=(ho, wo))
        else:
            stg["Mo"] = Md
        stg.update(Md=Md, Cout=blocks_cfg[-1]["cout"], max_total=max_total,
                   blocks=blocks_prep, has_pool=has_pool)
        stg["kernel"] = _make_stage_kernel(dict(
            has_down=has_down, has_pool=has_pool, shifts_pre=shifts_pre,
            shifts_blk=tap_shifts(Wd), blocks=blocks_cfg))
        stages.append(stg)
        H, W = Hd, Wd

    prep["stages"] = stages
    return prep


# ----------------------------- pallas_call wrappers ------------------------------

def _full_spec(shape):
    rank = len(shape)
    return pl.BlockSpec(tuple(shape), lambda n, _r=rank: (0,) * _r)


def _stem_call(x, stm):
    N, Cin, M = x.shape
    args = [stm["w0"], stm["b0"], stm["mask_full"], stm["sel"]]
    if stm["convs"]:
        args.append(stm["mask_sub"])
        for (w, b) in stm["convs"]:
            args += [w, b]
    specs = [_full_spec(a.shape) for a in args]
    C0, Ms = stm["Cout"], stm["Ms"]
    return pl.pallas_call(
        stm["kernel"],
        out_shape=jax.ShapeDtypeStruct((N, C0, Ms), ACT_DTYPE),
        grid=(N,),
        in_specs=[pl.BlockSpec((1, Cin, M), lambda n: (n, 0, 0))] + specs,
        out_specs=pl.BlockSpec((1, C0, Ms), lambda n: (n, 0, 0)),
        compiler_params=_CP,
    )(x, *args)


def _stage_call(x, stg):
    N, Cin, M = x.shape
    args = []
    if stg["has_down"]:
        args += [stg["dw_w"], stg["dw_b"], stg["mask_pre"], stg["sel"]]
    args.append(stg["mask_blk"])
    for bp in stg["blocks"]:
        for (w, b) in bp["layers"]:
            args += [w, b]
        args += [bp["w_agg"], bp["b_agg"], bp["w_att"], bp["b_att"]]
    if stg["has_pool"]:
        args.append(stg["pool"])
    specs = [_full_spec(a.shape) for a in args]

    Md, Mo, Cout = stg["Md"], stg["Mo"], stg["Cout"]
    out_dtype = jnp.float32 if stg["has_pool"] else ACT_DTYPE
    return pl.pallas_call(
        stg["kernel"],
        out_shape=jax.ShapeDtypeStruct((N, Cout, Mo), out_dtype),
        grid=(N,),
        in_specs=[pl.BlockSpec((1, Cin, M), lambda n: (n, 0, 0))] + specs,
        out_specs=pl.BlockSpec((1, Cout, Mo), lambda n: (n, 0, 0)),
        scratch_shapes=[pltpu.VMEM((stg["max_total"], Md), jnp.float32)],
        compiler_params=_CP,
    )(x, *args)


def backbone_forward(x_nchw, prep):
    N, Cin, H, W = x_nchw.shape
    cin_pad = prep["cin_pad"]
    x = x_nchw.astype(jnp.float32)
    if cin_pad > Cin:                       # zero-pad RGB->8ch so tap stacks align
        x = jnp.pad(x, ((0, 0), (0, cin_pad - Cin), (0, 0), (0, 0)))
    x = x.reshape(N, cin_pad, H * W)        # NCHW -> (N, C, HW)
    x = _stem_call(x, prep["stem"])         # det=False -> self.pool is Identity
    for stg in prep["stages"]:
        x = _stage_call(x, stg)
    ho, wo = prep["stages"][-1]["pool_hw"]
    return x.reshape(N, x.shape[1], ho, wo)  # -> NCHW


# ----------------------------- parameter init ------------------------------

class _KeyGen:
    def __init__(self, key):
        self.key = key

    def __call__(self):
        self.key, sub = jax.random.split(self.key)
        return sub


def init_convbn(kg, cin, cout, k, groups=1):
    return dict(
        w=0.1 * jax.random.normal(kg(), (cout, cin // groups, k, k), jnp.float32),
        gamma=1.0 + 0.1 * jax.random.normal(kg(), (cout,), jnp.float32),
        beta=0.1 * jax.random.normal(kg(), (cout,), jnp.float32),
        mean=0.1 * jax.random.normal(kg(), (cout,), jnp.float32),
        var=1.0 + 0.1 * jax.random.uniform(kg(), (cout,), jnp.float32),
    )


def init_ese(kg, ch):
    return dict(
        w=0.1 * jax.random.normal(kg(), (ch, ch, 1, 1), jnp.float32),
        b=0.1 * jax.random.normal(kg(), (ch,), jnp.float32),
    )


def init_backbone_params(key, stem_ch, stage_config, layer_num, in_ch=3):
    kg = _KeyGen(key)
    stem_ch = [in_ch] + list(stem_ch)
    stem = []
    for i in range(len(stem_ch) - 1):
        stem.append(dict(p=init_convbn(kg, stem_ch[i], stem_ch[i + 1], 3),
                         stride=(2, 2) if i == 0 else (1, 1)))
    stages = []
    for name in stage_config:
        cin, mid, cout, block_num, downsample, stride = stage_config[name]
        st = {"downsample": None, "blocks": []}
        if downsample:
            st["downsample"] = dict(p=init_convbn(kg, cin, cin, 3, groups=cin),
                                    stride=tuple(stride))
        b_in = cin
        for b in range(block_num):
            layers = []
            l_in = b_in
            for _ in range(layer_num):
                layers.append(init_convbn(kg, l_in, mid, 3))
                l_in = mid
            st["blocks"].append(dict(layers=layers,
                                     agg=init_convbn(kg, b_in + layer_num * mid, cout, 1),
                                     att=init_ese(kg, cout),
                                     identity=(b > 0)))
            b_in = cout
        stages.append(st)
    return dict(stem=stem, stages=stages)


# ----------------------------- pure-JAX reference ------------------------------
# The reference mirrors the kernels' quantization points (bf16 MXU operands with f32
# accumulation, bf16 activations at pallas_call boundaries) so the comparison checks
# the Pallas implementation itself.  Set MXU_DTYPE = jnp.float32 for full precision.

def _q(t):
    return t.astype(MXU_DTYPE).astype(jnp.float32)


def _ref_conv_bn(x, p, stride, ksize, act, groups=1, mxu=True):
    w, b = fold_bn(p)
    pad = (ksize - 1) // 2
    if mxu:
        x, w = _q(x), _q(w)
    y = lax.conv_general_dilated(
        x, w, window_strides=stride, padding=[(pad, pad), (pad, pad)],
        dimension_numbers=("NCHW", "OIHW", "NCHW"), feature_group_count=groups)
    y = y + b[None, :, None, None]
    return jnp.maximum(y, 0.0) if act else y


def _ref_ese(x, p, residual=None):
    pooled = jnp.mean(x, axis=(2, 3))                               # (N, C)
    s = jax.nn.sigmoid(_q(pooled) @ _q(p["w"][:, :, 0, 0]).T + p["b"])
    out = x * s[:, :, None, None]
    if residual is not None:
        out = out + residual
    return out


def ref_backbone(x, params):
    x = x.astype(jnp.float32)
    for s in params["stem"]:
        x = _ref_conv_bn(x, s["p"], s["stride"], 3, act=True)
    for st in params["stages"]:
        x = _q(x)                      # inter-kernel activations live in HBM as bf16
        if st["downsample"] is not None:
            x = _ref_conv_bn(x, st["downsample"]["p"], st["downsample"]["stride"],
                             3, act=False, groups=x.shape[1], mxu=False)
        for blk in st["blocks"]:
            identity = x
            outs = [x]
            h = x
            for lp in blk["layers"]:
                h = _ref_conv_bn(h, lp, (1, 1), 3, act=True)
                outs.append(h)
            cat = jnp.concatenate(outs, axis=1)
            agg = _ref_conv_bn(cat, blk["agg"], (1, 1), 1, act=True)
            x = _ref_ese(agg, blk["att"],
                         residual=identity if blk["identity"] else None)
    n, c, h, w = x.shape
    ho, wo = (h - 3) // 3 + 1, (w - 2) // 2 + 1
    xc = x[:, :, :ho * 3, :wo * 2].reshape(n, c, ho, 3, wo, 2)
    return xc.mean(axis=(3, 5))


# ----------------------------- main ------------------------------

if __name__ == "__main__":
    key = jax.random.PRNGKey(0)
    kp, kx = jax.random.split(key)

    stem_ch = [8, 8]
    layer_num = 2
    stage_config = {
        "stage1": [8, 8, 16, 1, False, [2, 1]],
        "stage2": [16, 8, 16, 2, True, [2, 1]],
        "stage3": [16, 8, 24, 1, True, [2, 1]],
        "stage4": [24, 16, 32, 1, True, [1, 2]],
    }

    params = init_backbone_params(kp, stem_ch, stage_config, layer_num, in_ch=3)
    x = jax.random.normal(kx, (2, 3, 32, 16), jnp.float32)        # NCHW input

    prep = prepare_backbone(params, x.shape)                      # one-time weight prep
    out = jax.block_until_ready(backbone_forward(x, prep))
    ref = jax.block_until_ready(ref_backbone(x, params))

    assert out.shape == ref.shape == (2, 32, 1, 2), (out.shape, ref.shape)
    err = float(jnp.max(jnp.abs(out - ref)))
    if err > 1e-2:
        raise AssertionError(f"mismatch vs reference, max abs err = {err}")
    print("KERNEL_OK")
</pallas_src>

<mosaic_0001>
module attributes {stable_mosaic.version = 11 : i64} {
  func.func @kernel(%arg0: i32, %arg1: memref<1x8x512xf32, #tpu.memory_space<vmem>>, %arg2: memref<8x72xbf16, #tpu.memory_space<vmem>>, %arg3: memref<8x1xf32, #tpu.memory_space<vmem>>, %arg4: memref<9x1x512xf32, #tpu.memory_space<vmem>>, %arg5: memref<512x128xbf16, #tpu.memory_space<vmem>>, %arg6: memref<9x1x128xf32, #tpu.memory_space<vmem>>, %arg7: memref<8x72xbf16, #tpu.memory_space<vmem>>, %arg8: memref<8x1xf32, #tpu.memory_space<vmem>>, %arg9: memref<1x8x128xbf16, #tpu.memory_space<vmem>>) attributes {dimension_semantics = [#tpu.dimension_semantics<parallel>], iteration_bounds = array<i64: 2>, scalar_prefetch = 0 : i64, scratch_operands = 0 : i64, tpu.core_type = #tpu.core_type<tc>, window_params = [{transform_indices = @transform_0, window_bounds = array<i64: 1, 8, 512>}, {pipeline_mode = #tpu.pipeline_mode<synchronous>, transform_indices = @transform_1, window_bounds = array<i64: 8, 72>}, {pipeline_mode = #tpu.pipeline_mode<synchronous>, transform_indices = @transform_2, window_bounds = array<i64: 8, 1>}, {pipeline_mode = #tpu.pipeline_mode<synchronous>, transform_indices = @transform_3, window_bounds = array<i64: 9, 1, 512>}, {pipeline_mode = #tpu.pipeline_mode<synchronous>, transform_indices = @transform_4, window_bounds = array<i64: 512, 128>}, {pipeline_mode = #tpu.pipeline_mode<synchronous>, transform_indices = @transform_5, window_bounds = array<i64: 9, 1, 128>}, {pipeline_mode = #tpu.pipeline_mode<synchronous>, transform_indices = @transform_6, window_bounds = array<i64: 8, 72>}, {pipeline_mode = #tpu.pipeline_mode<synchronous>, transform_indices = @transform_7, window_bounds = array<i64: 8, 1>}, {transform_indices = @transform_8, window_bounds = array<i64: 1, 8, 128>}]} {
    %c0 = arith.constant 0 : index
    %c0_0 = arith.constant 0 : index
    %0 = vector.load %arg2[%c0, %c0_0] : memref<8x72xbf16, #tpu.memory_space<vmem>>, vector<8x72xbf16>
    %c0_1 = arith.constant 0 : index
    %c0_2 = arith.constant 0 : index
    %1 = vector.load %arg3[%c0_1, %c0_2] : memref<8x1xf32, #tpu.memory_space<vmem>>, vector<8x1xf32>
    %c0_3 = arith.constant 0 : index
    %c0_4 = arith.constant 0 : index
    %2 = vector.load %arg5[%c0_3, %c0_4] : memref<512x128xbf16, #tpu.memory_space<vmem>>, vector<512x128xbf16>
    %c0_5 = arith.constant 0 : index
    %c0_6 = arith.constant 0 : index
    %c0_7 = arith.constant 0 : index
    %3 = vector.load %arg1[%c0_5, %c0_6, %c0_7] : memref<1x8x512xf32, #tpu.memory_space<vmem>>, vector<1x8x512xf32>
    %4 = vector.shape_cast %3 : vector<1x8x512xf32> to vector<8x512xf32>
    %c0_8 = arith.constant 0 : index
    %c0_9 = arith.constant 0 : index
    %c0_10 = arith.constant 0 : index
    %5 = vector.load %arg4[%c0_8, %c0_9, %c0_10] : memref<9x1x512xf32, #tpu.memory_space<vmem>>, vector<1x1x512xf32>
    %6 = vector.shape_cast %5 : vector<1x1x512xf32> to vector<1x512xf32>
    %c1 = arith.constant 1 : index
    %c0_11 = arith.constant 0 : index
    %c0_12 = arith.constant 0 : index
    %7 = vector.load %arg4[%c1, %c0_11, %c0_12] : memref<9x1x512xf32, #tpu.memory_space<vmem>>, vector<1x1x512xf32>
    %8 = vector.shape_cast %7 : vector<1x1x512xf32> to vector<1x512xf32>
    %c2 = arith.constant 2 : index
    %c0_13 = arith.constant 0 : index
    %c0_14 = arith.constant 0 : index
    %9 = vector.load %arg4[%c2, %c0_13, %c0_14] : memref<9x1x512xf32, #tpu.memory_space<vmem>>, vector<1x1x512xf32>
    %10 = vector.shape_cast %9 : vector<1x1x512xf32> to vector<1x512xf32>
    %c3 = arith.constant 3 : index
    %c0_15 = arith.constant 0 : index
    %c0_16 = arith.constant 0 : index
    %11 = vector.load %arg4[%c3, %c0_15, %c0_16] : memref<9x1x512xf32, #tpu.memory_space<vmem>>, vector<1x1x512xf32>
    %12 = vector.shape_cast %11 : vector<1x1x512xf32> to vector<1x512xf32>
    %c5 = arith.constant 5 : index
    %c0_17 = arith.constant 0 : index
    %c0_18 = arith.constant 0 : index
    %13 = vector.load %arg4[%c5, %c0_17, %c0_18] : memref<9x1x512xf32, #tpu.memory_space<vmem>>, vector<1x1x512xf32>
    %14 = vector.shape_cast %13 : vector<1x1x512xf32> to vector<1x512xf32>
    %c6 = arith.constant 6 : index
    %c0_19 = arith.constant 0 : index
    %c0_20 = arith.constant 0 : index
    %15 = vector.load %arg4[%c6, %c0_19, %c0_20] : memref<9x1x512xf32, #tpu.memory_space<vmem>>, vector<1x1x512xf32>
    %16 = vector.shape_cast %15 : vector<1x1x512xf32> to vector<1x512xf32>
    %c7 = arith.constant 7 : index
    %c0_21 = arith.constant 0 : index
    %c0_22 = arith.constant 0 : index
    %17 = vector.load %arg4[%c7, %c0_21, %c0_22] : memref<9x1x512xf32, #tpu.memory_space<vmem>>, vector<1x1x512xf32>
    %18 = vector.shape_cast %17 : vector<1x1x512xf32> to vector<1x512xf32>
    %c8 = arith.constant 8 : index
    %c0_23 = arith.constant 0 : index
    %c0_24 = arith.constant 0 : index
    %19 = vector.load %arg4[%c8, %c0_23, %c0_24] : memref<9x1x512xf32, #tpu.memory_space<vmem>>, vector<1x1x512xf32>
    %20 = vector.shape_cast %19 : vector<1x1x512xf32> to vector<1x512xf32>
    %21 = vector.extract_strided_slice %4 {offsets = [0, 495], sizes = [8, 17], strides = [1, 1]} : vector<8x512xf32> to vector<8x17xf32>
    %22 = vector.extract_strided_slice %4 {offsets = [0, 0], sizes = [8, 495], strides = [1, 1]} : vector<8x512xf32> to vector<8x495xf32>
    %23 = tpu.concatenate %21, %22 in 1 : vector<8x17xf32>, vector<8x495xf32> -> vector<8x512xf32>
    %24 = vector.broadcast %6 : vector<1x512xf32> to vector<8x512xf32>
    %25 = arith.mulf %23, %24 : vector<8x512xf32>
    %26 = vector.extract_strided_slice %4 {offsets = [0, 496], sizes = [8, 16], strides = [1, 1]} : vector<8x512xf32> to vector<8x16xf32>
    %27 = vector.extract_strided_slice %4 {offsets = [0, 0], sizes = [8, 496], strides = [1, 1]} : vector<8x512xf32> to vector<8x496xf32>
    %28 = tpu.concatenate %26, %27 in 1 : vector<8x16xf32>, vector<8x496xf32> -> vector<8x512xf32>
    %29 = vector.broadcast %8 : vector<1x512xf32> to vector<8x512xf32>
    %30 = arith.mulf %28, %29 : vector<8x512xf32>
    %31 = vector.extract_strided_slice %4 {offsets = [0, 497], sizes = [8, 15], strides = [1, 1]} : vector<8x512xf32> to vector<8x15xf32>
    %32 = vector.extract_strided_slice %4 {offsets = [0, 0], sizes = [8, 497], strides = [1, 1]} : vector<8x512xf32> to vector<8x497xf32>
    %33 = tpu.concatenate %31, %32 in 1 : vector<8x15xf32>, vector<8x497xf32> -> vector<8x512xf32>
    %34 = vector.broadcast %10 : vector<1x512xf32> to vector<8x512xf32>
    %35 = arith.mulf %33, %34 : vector<8x512xf32>
    %36 = vector.extract_strided_slice %4 {offsets = [0, 511], sizes = [8, 1], strides = [1, 1]} : vector<8x512xf32> to vector<8x1xf32>
    %37 = vector.extract_strided_slice %4 {offsets = [0, 0], sizes = [8, 511], strides = [1, 1]} : vector<8x512xf32> to vector<8x511xf32>
    %38 = tpu.concatenate %36, %37 in 1 : vector<8x1xf32>, vector<8x511xf32> -> vector<8x512xf32>
    %39 = vector.broadcast %12 : vector<1x512xf32> to vector<8x512xf32>
    %40 = arith.mulf %38, %39 : vector<8x512xf32>
    %41 = vector.extract_strided_slice %4 {offsets = [0, 1], sizes = [8, 511], strides = [1, 1]} : vector<8x512xf32> to vector<8x511xf32>
    %42 = vector.extract_strided_slice %4 {offsets = [0, 0], sizes = [8, 1], strides = [1, 1]} : vector<8x512xf32> to vector<8x1xf32>
    %43 = tpu.concatenate %41, %42 in 1 : vector<8x511xf32>, vector<8x1xf32> -> vector<8x512xf32>
    %44 = vector.broadcast %14 : vector<1x512xf32> to vector<8x512xf32>
    %45 = arith.mulf %43, %44 : vector<8x512xf32>
    %46 = vector.extract_strided_slice %4 {offsets = [0, 15], sizes = [8, 497], strides = [1, 1]} : vector<8x512xf32> to vector<8x497xf32>
    %47 = vector.extract_strided_slice %4 {offsets = [0, 0], sizes = [8, 15], strides = [1, 1]} : vector<8x512xf32> to vector<8x15xf32>
    %48 = tpu.concatenate %46, %47 in 1 : vector<8x497xf32>, vector<8x15xf32> -> vector<8x512xf32>
    %49 = vector.broadcast %16 : vector<1x512xf32> to vector<8x512xf32>
    %50 = arith.mulf %48, %49 : vector<8x512xf32>
    %51 = vector.extract_strided_slice %4 {offsets = [0, 16], sizes = [8, 496], strides = [1, 1]} : vector<8x512xf32> to vector<8x496xf32>
    %52 = vector.extract_strided_slice %4 {offsets = [0, 0], sizes = [8, 16], strides = [1, 1]} : vector<8x512xf32> to vector<8x16xf32>
    %53 = tpu.concatenate %51, %52 in 1 : vector<8x496xf32>, vector<8x16xf32> -> vector<8x512xf32>
    %54 = vector.broadcast %18 : vector<1x512xf32> to vector<8x512xf32>
    %55 = arith.mulf %53, %54 : vector<8x512xf32>
    %56 = vector.extract_strided_slice %4 {offsets = [0, 17], sizes = [8, 495], strides = [1, 1]} : vector<8x512xf32> to vector<8x495xf32>
    %57 = vector.extract_strided_slice %4 {offsets = [0, 0], sizes = [8, 17], strides = [1, 1]} : vector<8x512xf32> to vector<8x17xf32>
    %58 = tpu.concatenate %56, %57 in 1 : vector<8x495xf32>, vector<8x17xf32> -> vector<8x512xf32>
    %59 = vector.broadcast %20 : vector<1x512xf32> to vector<8x512xf32>
    %60 = arith.mulf %58, %59 : vector<8x512xf32>
    %61 = tpu.concatenate %25, %30, %35, %40, %4, %45, %50, %55, %60 in 0 : vector<8x512xf32>, vector<8x512xf32>, vector<8x512xf32>, vector<8x512xf32>, vector<8x512xf32>, vector<8x512xf32>, vector<8x512xf32>, vector<8x512xf32>, vector<8x512xf32> -> vector<72x512xf32>
    %62 = arith.truncf %61 : vector<72x512xf32> to vector<72x512xbf16>
    %cst = arith.constant dense<0.000000e+00> : vector<8x512xf32>
    %63 = tpu.matmul %0, %62, %cst {dimension_numbers = #tpu.dot_dimension_numbers<[1], [0], [0], [1], [0, 0, 1, 1], [], []>} : vector<8x72xbf16>, vector<72x512xbf16>, vector<8x512xf32> -> vector<8x512xf32>
    %64 = vector.broadcast %1 : vector<8x1xf32> to vector<8x512xf32>
    %65 = arith.addf %63, %64 : vector<8x512xf32>
    %cst_25 = arith.constant 0.000000e+00 : f32
    %66 = vector.broadcast %cst_25 : f32 to vector<8x512xf32>
    %67 = arith.maximumf %65, %66 : vector<8x512xf32>
    %68 = arith.truncf %67 : vector<8x512xf32> to vector<8x512xbf16>
    %cst_26 = arith.constant dense<0.000000e+00> : vector<8x128xf32>
    %69 = tpu.matmul %68, %2, %cst_26 {dimension_numbers = #tpu.dot_dimension_numbers<[1], [0], [0], [1], [0, 0, 1, 1], [], []>} : vector<8x512xbf16>, vector<512x128xbf16>, vector<8x128xf32> -> vector<8x128xf32>
    %c0_27 = arith.constant 0 : index
    %c0_28 = arith.constant 0 : index
    %c0_29 = arith.constant 0 : index
    %70 = vector.load %arg6[%c0_27, %c0_28, %c0_29] : memref<9x1x128xf32, #tpu.memory_space<vmem>>, vector<1x1x128xf32>
    %71 = vector.shape_cast %70 : vector<1x1x128xf32> to vector<1x128xf32>
    %c1_30 = arith.constant 1 : index
    %c0_31 = arith.constant 0 : index
    %c0_32 = arith.constant 0 : index
    %72 = vector.load %arg6[%c1_30, %c0_31, %c0_32] : memref<9x1x128xf32, #tpu.memory_space<vmem>>, vector<1x1x128xf32>
    %73 = vector.shape_cast %72 : vector<1x1x128xf32> to vector<1x128xf32>
    %c2_33 = arith.constant 2 : index
    %c0_34 = arith.constant 0 : index
    %c0_35 = arith.constant 0 : index
    %74 = vector.load %arg6[%c2_33, %c0_34, %c0_35] : memref<9x1x128xf32, #tpu.memory_space<vmem>>, vector<1x1x128xf32>
    %75 = vector.shape_cast %74 : vector<1x1x128xf32> to vector<1x128xf32>
    %c3_36 = arith.constant 3 : index
    %c0_37 = arith.constant 0 : index
    %c0_38 = arith.constant 0 : index
    %76 = vector.load %arg6[%c3_36, %c0_37, %c0_38] : memref<9x1x128xf32, #tpu.memory_space<vmem>>, vector<1x1x128xf32>
    %77 = vector.shape_cast %76 : vector<1x1x128xf32> to vector<1x128xf32>
    %c5_39 = arith.constant 5 : index
    %c0_40 = arith.constant 0 : index
    %c0_41 = arith.constant 0 : index
    %78 = vector.load %arg6[%c5_39, %c0_40, %c0_41] : memref<9x1x128xf32, #tpu.memory_space<vmem>>, vector<1x1x128xf32>
    %79 = vector.shape_cast %78 : vector<1x1x128xf32> to vector<1x128xf32>
    %c6_42 = arith.constant 6 : index
    %c0_43 = arith.constant 0 : index
    %c0_44 = arith.constant 0 : index
    %80 = vector.load %arg6[%c6_42, %c0_43, %c0_44] : memref<9x1x128xf32, #tpu.memory_space<vmem>>, vector<1x1x128xf32>
    %81 = vector.shape_cast %80 : vector<1x1x128xf32> to vector<1x128xf32>
    %c7_45 = arith.constant 7 : index
    %c0_46 = arith.constant 0 : index
    %c0_47 = arith.constant 0 : index
    %82 = vector.load %arg6[%c7_45, %c0_46, %c0_47] : memref<9x1x128xf32, #tpu.memory_space<vmem>>, vector<1x1x128xf32>
    %83 = vector.shape_cast %82 : vector<1x1x128xf32> to vector<1x128xf32>
    %c8_48 = arith.constant 8 : index
    %c0_49 = arith.constant 0 : index
    %c0_50 = arith.constant 0 : index
    %84 = vector.load %arg6[%c8_48, %c0_49, %c0_50] : memref<9x1x128xf32, #tpu.memory_space<vmem>>, vector<1x1x128xf32>
    %85 = vector.shape_cast %84 : vector<1x1x128xf32> to vector<1x128xf32>
    %c0_51 = arith.constant 0 : index
    %c0_52 = arith.constant 0 : index
    %86 = vector.load %arg7[%c0_51, %c0_52] : memref<8x72xbf16, #tpu.memory_space<vmem>>, vector<8x72xbf16>
    %c0_53 = arith.constant 0 : index
    %c0_54 = arith.constant 0 : index
    %87 = vector.load %arg8[%c0_53, %c0_54] : memref<8x1xf32, #tpu.memory_space<vmem>>, vector<8x1xf32>
    %88 = vector.extract_strided_slice %69 {offsets = [0, 119], sizes = [8, 9], strides = [1, 1]} : vector<8x128xf32> to vector<8x9xf32>
    %89 = vector.extract_strided_slice %69 {offsets = [0, 0], sizes = [8, 119], strides = [1, 1]} : vector<8x128xf32> to vector<8x119xf32>
    %90 = tpu.concatenate %88, %89 in 1 : vector<8x9xf32>, vector<8x119xf32> -> vector<8x128xf32>
    %91 = vector.broadcast %71 : vector<1x128xf32> to vector<8x128xf32>
    %92 = arith.mulf %90, %91 : vector<8x128xf32>
    %93 = vector.extract_strided_slice %69 {offsets = [0, 120], sizes = [8, 8], strides = [1, 1]} : vector<8x128xf32> to vector<8x8xf32>
    %94 = vector.extract_strided_slice %69 {offsets = [0, 0], sizes = [8, 120], strides = [1, 1]} : vector<8x128xf32> to vector<8x120xf32>
    %95 = tpu.concatenate %93, %94 in 1 : vector<8x8xf32>, vector<8x120xf32> -> vector<8x128xf32>
    %96 = vector.broadcast %73 : vector<1x128xf32> to vector<8x128xf32>
    %97 = arith.mulf %95, %96 : vector<8x128xf32>
    %98 = vector.extract_strided_slice %69 {offsets = [0, 121], sizes = [8, 7], strides = [1, 1]} : vector<8x128xf32> to vector<8x7xf32>
    %99 = vector.extract_strided_slice %69 {offsets = [0, 0], sizes = [8, 121], strides = [1, 1]} : vector<8x128xf32> to vector<8x121xf32>
    %100 = tpu.concatenate %98, %99 in 1 : vector<8x7xf32>, vector<8x121xf32> -> vector<8x128xf32>
    %101 = vector.broadcast %75 : vector<1x128xf32> to vector<8x128xf32>
    %102 = arith.mulf %100, %101 : vector<8x128xf32>
    %103 = vector.extract_strided_slice %69 {offsets = [0, 127], sizes = [8, 1], strides = [1, 1]} : vector<8x128xf32> to vector<8x1xf32>
    %104 = vector.extract_strided_slice %69 {offsets = [0, 0], sizes = [8, 127], strides = [1, 1]} : vector<8x128xf32> to vector<8x127xf32>
    %105 = tpu.concatenate %103, %104 in 1 : vector<8x1xf32>, vector<8x127xf32> -> vector<8x128xf32>
    %106 = vector.broadcast %77 : vector<1x128xf32> to vector<8x128xf32>
    %107 = arith.mulf %105, %106 : vector<8x128xf32>
    %108 = vector.extract_strided_slice %69 {offsets = [0, 1], sizes = [8, 127], strides = [1, 1]} : vector<8x128xf32> to vector<8x127xf32>
    %109 = vector.extract_strided_slice %69 {offsets = [0, 0], sizes = [8, 1], strides = [1, 1]} : vector<8x128xf32> to vector<8x1xf32>
    %110 = tpu.concatenate %108, %109 in 1 : vector<8x127xf32>, vector<8x1xf32> -> vector<8x128xf32>
    %111 = vector.broadcast %79 : vector<1x128xf32> to vector<8x128xf32>
    %112 = arith.mulf %110, %111 : vector<8x128xf32>
    %113 = vector.extract_strided_slice %69 {offsets = [0, 7], sizes = [8, 121], strides = [1, 1]} : vector<8x128xf32> to vector<8x121xf32>
    %114 = vector.extract_strided_slice %69 {offsets = [0, 0], sizes = [8, 7], strides = [1, 1]} : vector<8x128xf32> to vector<8x7xf32>
    %115 = tpu.concatenate %113, %114 in 1 : vector<8x121xf32>, vector<8x7xf32> -> vector<8x128xf32>
    %116 = vector.broadcast %81 : vector<1x128xf32> to vector<8x128xf32>
    %117 = arith.mulf %115, %116 : vector<8x128xf32>
    %118 = vector.extract_strided_slice %69 {offsets = [0, 8], sizes = [8, 120], strides = [1, 1]} : vector<8x128xf32> to vector<8x120xf32>
    %119 = vector.extract_strided_slice %69 {offsets = [0, 0], sizes = [8, 8], strides = [1, 1]} : vector<8x128xf32> to vector<8x8xf32>
    %120 = tpu.concatenate %118, %119 in 1 : vector<8x120xf32>, vector<8x8xf32> -> vector<8x128xf32>
    %121 = vector.broadcast %83 : vector<1x128xf32> to vector<8x128xf32>
    %122 = arith.mulf %120, %121 : vector<8x128xf32>
    %123 = vector.extract_strided_slice %69 {offsets = [0, 9], sizes = [8, 119], strides = [1, 1]} : vector<8x128xf32> to vector<8x119xf32>
    %124 = vector.extract_strided_slice %69 {offsets = [0, 0], sizes = [8, 9], strides = [1, 1]} : vector<8x128xf32> to vector<8x9xf32>
    %125 = tpu.concatenate %123, %124 in 1 : vector<8x119xf32>, vector<8x9xf32> -> vector<8x128xf32>
    %126 = vector.broadcast %85 : vector<1x128xf32> to vector<8x128xf32>
    %127 = arith.mulf %125, %126 : vector<8x128xf32>
    %128 = tpu.concatenate %92, %97, %102, %107, %69, %112, %117, %122, %127 in 0 : vector<8x128xf32>, vector<8x128xf32>, vector<8x128xf32>, vector<8x128xf32>, vector<8x128xf32>, vector<8x128xf32>, vector<8x128xf32>, vector<8x128xf32>, vector<8x128xf32> -> vector<72x128xf32>
    %129 = arith.truncf %128 : vector<72x128xf32> to vector<72x128xbf16>
    %cst_55 = arith.constant dense<0.000000e+00> : vector<8x128xf32>
    %130 = tpu.matmul %86, %129, %cst_55 {dimension_numbers = #tpu.dot_dimension_numbers<[1], [0], [0], [1], [0, 0, 1, 1], [], []>} : vector<8x72xbf16>, vector<72x128xbf16>, vector<8x128xf32> -> vector<8x128xf32>
    %131 = vector.broadcast %87 : vector<8x1xf32> to vector<8x128xf32>
    %132 = arith.addf %130, %131 : vector<8x128xf32>
    %cst_56 = arith.constant 0.000000e+00 : f32
    %133 = vector.broadcast %cst_56 : f32 to vector<8x128xf32>
    %134 = arith.maximumf %132, %133 : vector<8x128xf32>
    %135 = arith.truncf %134 : vector<8x128xf32> to vector<8x128xbf16>
    %c0_57 = arith.constant 0 : index
    %c0_58 = arith.constant 0 : index
    %c0_59 = arith.constant 0 : index
    %136 = vector.load %arg9[%c0_57, %c0_58, %c0_59] : memref<1x8x128xbf16, #tpu.memory_space<vmem>>, vector<1x8x128xbf16>
    %137 = vector.shape_cast %136 : vector<1x8x128xbf16> to vector<8x128xbf16>
    %138 = vector.shape_cast %135 : vector<8x128xbf16> to vector<1x8x128xbf16>
    tpu.vector_store %arg9[%c0_57, %c0_58, %c0_59], %138 {strides = array<i32>} : memref<1x8x128xbf16, #tpu.memory_space<vmem>>, vector<1x8x128xbf16>,
    return
  }
  func.func @transform_0(%arg0: i32) -> (i32, i32, i32) {
    %c0_i32 = arith.constant 0 : i32
    %c0_i32_0 = arith.constant 0 : i32
    %c0_i32_1 = arith.constant 0 : i32
    return %arg0, %c0_i32, %c0_i32_0 : i32, i32, i32
  }
  func.func @transform_1(%arg0: i32) -> (i32, i32) {
    %c0_i32 = arith.constant 0 : i32
    %c0_i32_0 = arith.constant 0 : i32
    %c0_i32_1 = arith.constant 0 : i32
    return %c0_i32, %c0_i32_0 : i32, i32
  }
  func.func @transform_2(%arg0: i32) -> (i32, i32) {
    %c0_i32 = arith.constant 0 : i32
    %c0_i32_0 = arith.constant 0 : i32
    %c0_i32_1 = arith.constant 0 : i32
    return %c0_i32, %c0_i32_0 : i32, i32
  }
  func.func @transform_3(%arg0: i32) -> (i32, i32, i32) {
    %c0_i32 = arith.constant 0 : i32
    %c0_i32_0 = arith.constant 0 : i32
    %c0_i32_1 = arith.constant 0 : i32
    %c0_i32_2 = arith.constant 0 : i32
    return %c0_i32, %c0_i32_0, %c0_i32_1 : i32, i32, i32
  }
  func.func @transform_4(%arg0: i32) -> (i32, i32) {
    %c0_i32 = arith.constant 0 : i32
    %c0_i32_0 = arith.constant 0 : i32
    %c0_i32_1 = arith.constant 0 : i32
    return %c0_i32, %c0_i32_0 : i32, i32
  }
  func.func @transform_5(%arg0: i32) -> (i32, i32, i32) {
    %c0_i32 = arith.constant 0 : i32
    %c0_i32_0 = arith.constant 0 : i32
    %c0_i32_1 = arith.constant 0 : i32
    %c0_i32_2 = arith.constant 0 : i32
    return %c0_i32, %c0_i32_0, %c0_i32_1 : i32, i32, i32
  }
  func.func @transform_6(%arg0: i32) -> (i32, i32) {
    %c0_i32 = arith.constant 0 : i32
    %c0_i32_0 = arith.constant 0 : i32
    %c0_i32_1 = arith.constant 0 : i32
    return %c0_i32, %c0_i32_0 : i32, i32
  }
  func.func @transform_7(%arg0: i32) -> (i32, i32) {
    %c0_i32 = arith.constant 0 : i32
    %c0_i32_0 = arith.constant 0 : i32
    %c0_i32_1 = arith.constant 0 : i32
    return %c0_i32, %c0_i32_0 : i32, i32
  }
  func.func @transform_8(%arg0: i32) -> (i32, i32, i32) {
    %c0_i32 = arith.constant 0 : i32
    %c0_i32_0 = arith.constant 0 : i32
    %c0_i32_1 = arith.constant 0 : i32
    return %arg0, %c0_i32, %c0_i32_0 : i32, i32, i32
  }
}

</mosaic_0001>

<llo_original>
// kernel: tpu_custom_call.1
$region0: #{tpu_custom_call.1}
  #allocation0 [shape = 'u32[]', space=smem, size = 0x4, offset = 0x4, fixed_abs, tag = 'smem constant byte address 0x4 - core index']
  #allocation1 [shape = 'u32[144,128]{1,0:T(1,128)}', space=vmem, size = 0x12000, scoped, tag = 'internal scratch']
  %s0 = inlined_call_operand.hbm [shape: f32[2,8,512], index: 0, kind: input, shape index: {}]
  %s1 = inlined_call_operand.vmem [shape: bf16[8,72], index: 1, kind: input, shape index: {}]
  %s2 = inlined_call_operand.vmem [shape: f32[8,1], index: 2, kind: input, shape index: {}]
  %s3 = inlined_call_operand.hbm [shape: f32[9,1,512], index: 3, kind: input, shape index: {}]
  %s4 = inlined_call_operand.hbm [shape: bf16[512,128], index: 4, kind: input, shape index: {}]
  %s5 = inlined_call_operand.vmem [shape: f32[9,1,128], index: 5, kind: input, shape index: {}]
  %s6 = inlined_call_operand.vmem [shape: bf16[8,72], index: 6, kind: input, shape index: {}]
  %s7 = inlined_call_operand.vmem [shape: f32[8,1], index: 7, kind: input, shape index: {}]
  %s8 = inlined_call_operand.hbm [shape: bf16[2,8,128], index: 8, kind: output, shape index: {}]
  %s9 = sld [smem:[#allocation0]]
  $region77: #{tpu_custom_call.1} parent=0
    _
  %s11 = ssub.s32 1, %s9
  %s12 = scalar_select 0, %s11, %s9
  $region1: #{tpu_custom_call.1} parent=0
    #allocation2 [shape = 'u8[32768]{0}', space=vmem, size = 0x8000, scoped, tag = 'input window, operand 0']
    #allocation3 [shape = 's32[2]{0}', space=sflag, size = 0x8, scoped, tag = 'scoped memory for tpu_custom_call.1']
    #allocation4 [shape = 's32[2]{0}', space=sflag, size = 0x8, scoped, tag = 'scoped memory for tpu_custom_call.1']
    #allocation5 [shape = 'u8[18432]{0}', space=vmem, size = 0x4800, scoped, tag = 'input window, operand 3, single buffered']
    #allocation6 [shape = 's32[1]{0}', space=sflag, size = 0x4, scoped, tag = 'scoped memory for tpu_custom_call.1']
    #allocation7 [shape = 'u8[131072]{0}', space=vmem, size = 0x20000, scoped, tag = 'input window, operand 4, single buffered']
    #allocation8 [shape = 'u8[4096]{0}', space=vmem, size = 0x1000, scoped, tag = 'output window, operand 0']
    %13 = vsyncpa [#allocation3], 0
    %s14 = scalar_lea.sflag [#allocation3], 1
    %15 = vsyncpa %s14, 0
    %16 = vsyncpa [#allocation6], 0
    %17 = vsyncpa [#allocation4], 0
    %s18 = scalar_lea.sflag [#allocation4], 1
    %19 = vsyncpa %s18, 0
    loop: start=0, step=1, limit=4
    $region2: #{tpu_custom_call.1} parent=1 // loop_pre_header
      _
    $region3: #{tpu_custom_call.1} parent=1 // loop_header
      %s21 = sphi 0, %s25
      %p22 = scmp.ge.s32.totalorder %s21, 4
      %s31 = sphi 0, %s33
      %s34 = sphi 0, %s31
      %s35 = sphi 0, %s34
      %s51 = sphi 0, %s35
      %s55 = sphi 0, %s55
      %s57 = sphi 0, %s55
      %s58 = sphi 0, %s57
      %s72 = sphi 0, %s58
      %s76 = sphi 0, %s76
      %s78 = sphi 0, %s76
      %s79 = sphi 0, %s78
      %s93 = sphi 0, %s79
      %s97 = sphi 0, %s97
      %s99 = sphi 0, %s97
      %s100 = sphi 0, %s99
      %s114 = sphi 0, %s100
      %s118 = sphi 0, %s118
      %s120 = sphi 0, %s118
      %s121 = sphi 0, %s120
      %s135 = sphi 0, %s121
      %s139 = sphi 0, %s139
      %s141 = sphi 0, %s139
      %s142 = sphi 0, %s141
      %s156 = sphi 0, %s142
      %s160 = sphi 0, %s160
      %s162 = sphi 0, %s160
      %s163 = sphi 0, %s162
      %s177 = sphi 0, %s163
      %s181 = sphi 0, %s181
      %s183 = sphi 0, %s181
      %s184 = sphi 0, %s183
      %s198 = sphi 0, %s184
      %s204 = sphi 0, %s206
      %s207 = sphi 0, %s204
      %s208 = sphi 0, %s207
      %s224 = sphi 0, %s208
    $region4: #{tpu_custom_call.1} parent=1 // loop_header_branch
      %24 = sbr.rel (%p22) target = $region8
    $region5: #{tpu_custom_call.1} parent=1 // loop_body
      %s26 = ssub.s32 %s21, 1
      %s27 = ssub.s32 %s21, 2
      %s28 = sadd.s32 %s21, 1
      %s29 = ssub.s32 %s21, %s28
      %p30 = scmp.eq.s32.totalorder %s29, 0
      %s32 = sadd.s32 %s31, 1
      %s33 = scalar_select %p30, %s31, %s32
      %p36 = pneg %p30
      %p37 = scmp.eq.s32.totalorder %s21, 1
      %p38 = por %p36, %p37
      %p39 = scmp.ne.s32.totalorder %s31, %s34
      %p40 = scmp.eq.s32.totalorder %s21, 0
      %p41 = por %p39, %p40
      %p42 = scmp.ne.s32.totalorder %s31, %s34
      %p43 = scmp.eq.s32.totalorder %s26, 1
      %p44 = por %p42, %p43
      %p45 = scmp.ne.s32.totalorder %s34, %s35
      %p46 = scmp.eq.s32.totalorder %s26, 0
      %p47 = por %p45, %p46
      %p48 = scmp.ne.s32.totalorder %s34, %s35
      %p49 = scmp.eq.s32.totalorder %s27, 1
      %p50 = por %p48, %p49
      %p52 = scmp.ne.s32.totalorder %s35, %s51
      %p53 = scmp.eq.s32.totalorder %s27, 0
      %p54 = por %p52, %p53
      %s56 = sadd.s32 %s55, 1
      %p59 = scmp.eq.s32.totalorder %s21, 1
      %p60 = scmp.ne.s32.totalorder %s55, %s57
      %p61 = scmp.eq.s32.totalorder %s21, 0
      %p62 = por %p60, %p61
      %p63 = scmp.ne.s32.totalorder %s55, %s57
      %p64 = scmp.eq.s32.totalorder %s26, 1
      %p65 = por %p63, %p64
      %p66 = scmp.ne.s32.totalorder %s57, %s58
      %p67 = scmp.eq.s32.totalorder %s26, 0
      %p68 = por %p66, %p67
      %p69 = scmp.ne.s32.totalorder %s57, %s58
      %p70 = scmp.eq.s32.totalorder %s27, 1
      %p71 = por %p69, %p70
      %p73 = scmp.ne.s32.totalorder %s58, %s72
      %p74 = scmp.eq.s32.totalorder %s27, 0
      %p75 = por %p73, %p74
      %s77 = sadd.s32 %s76, 1
      %p80 = scmp.eq.s32.totalorder %s21, 1
      %p81 = scmp.ne.s32.totalorder %s76, %s78
      %p82 = scmp.eq.s32.totalorder %s21, 0
      %p83 = por %p81, %p82
      %p84 = scmp.ne.s32.totalorder %s76, %s78
      %p85 = scmp.eq.s32.totalorder %s26, 1
      %p86 = por %p84, %p85
      %p87 = scmp.ne.s32.totalorder %s78, %s79
      %p88 = scmp.eq.s32.totalorder %s26, 0
      %p89 = por %p87, %p88
      %p90 = scmp.ne.s32.totalorder %s78, %s79
      %p91 = scmp.eq.s32.totalorder %s27, 1
      %p92 = por %p90, %p91
      %p94 = scmp.ne.s32.totalorder %s79, %s93
      %p95 = scmp.eq.s32.totalorder %s27, 0
      %p96 = por %p94, %p95
      %s98 = sadd.s32 %s97, 1
      %p101 = scmp.eq.s32.totalorder %s21, 1
      %p102 = scmp.ne.s32.totalorder %s97, %s99
      %p103 = scmp.eq.s32.totalorder %s21, 0
      %p104 = por %p102, %p103
      %p105 = scmp.ne.s32.totalorder %s97, %s99
      %p106 = scmp.eq.s32.totalorder %s26, 1
      %p107 = por %p105, %p106
      %p108 = scmp.ne.s32.totalorder %s99, %s100
      %p109 = scmp.eq.s32.totalorder %s26, 0
      %p110 = por %p108, %p109
      %p111 = scmp.ne.s32.totalorder %s99, %s100
      %p112 = scmp.eq.s32.totalorder %s27, 1
      %p113 = por %p111, %p112
      %p115 = scmp.ne.s32.totalorder %s100, %s114
      %p116 = scmp.eq.s32.totalorder %s27, 0
      %p117 = por %p115, %p116
      %s119 = sadd.s32 %s118, 1
      %p122 = scmp.eq.s32.totalorder %s21, 1
      %p123 = scmp.ne.s32.totalorder %s118, %s120
      %p124 = scmp.eq.s32.totalorder %s21, 0
      %p125 = por %p123, %p124
      %p126 = scmp.ne.s32.totalorder %s118, %s120
      %p127 = scmp.eq.s32.totalorder %s26, 1
      %p128 = por %p126, %p127
      %p129 = scmp.ne.s32.totalorder %s120, %s121
      %p130 = scmp.eq.s32.totalorder %s26, 0
      %p131 = por %p129, %p130
      %p132 = scmp.ne.s32.totalorder %s120, %s121
      %p133 = scmp.eq.s32.totalorder %s27, 1
      %p134 = por %p132, %p133
      %p136 = scmp.ne.s32.totalorder %s121, %s135
      %p137 = scmp.eq.s32.totalorder %s27, 0
      %p138 = por %p136, %p137
      %s140 = sadd.s32 %s139, 1
      %p143 = scmp.eq.s32.totalorder %s21, 1
      %p144 = scmp.ne.s32.totalorder %s139, %s141
      %p145 = scmp.eq.s32.totalorder %s21, 0
      %p146 = por %p144, %p145
      %p147 = scmp.ne.s32.totalorder %s139, %s141
      %p148 = scmp.eq.s32.totalorder %s26, 1
      %p149 = por %p147, %p148
      %p150 = scmp.ne.s32.totalorder %s141, %s142
      %p151 = scmp.eq.s32.totalorder %s26, 0
      %p152 = por %p150, %p151
      %p153 = scmp.ne.s32.totalorder %s141, %s142
      %p154 = scmp.eq.s32.totalorder %s27, 1
      %p155 = por %p153, %p154
      %p157 = scmp.ne.s32.totalorder %s142, %s156
      %p158 = scmp.eq.s32.totalorder %s27, 0
      %p159 = por %p157, %p158
      %s161 = sadd.s32 %s160, 1
      %p164 = scmp.eq.s32.totalorder %s21, 1
      %p165 = scmp.ne.s32.totalorder %s160, %s162
      %p166 = scmp.eq.s32.totalorder %s21, 0
      %p167 = por %p165, %p166
      %p168 = scmp.ne.s32.totalorder %s160, %s162
      %p169 = scmp.eq.s32.totalorder %s26, 1
      %p170 = por %p168, %p169
      %p171 = scmp.ne.s32.totalorder %s162, %s163
      %p172 = scmp.eq.s32.totalorder %s26, 0
      %p173 = por %p171, %p172
      %p174 = scmp.ne.s32.totalorder %s162, %s163
      %p175 = scmp.eq.s32.totalorder %s27, 1
      %p176 = por %p174, %p175
      %p178 = scmp.ne.s32.totalorder %s163, %s177
      %p179 = scmp.eq.s32.totalorder %s27, 0
      %p180 = por %p178, %p179
      %s182 = sadd.s32 %s181, 1
      %p185 = scmp.eq.s32.totalorder %s21, 1
      %p186 = scmp.ne.s32.totalorder %s181, %s183
      %p187 = scmp.eq.s32.totalorder %s21, 0
      %p188 = por %p186, %p187
      %p189 = scmp.ne.s32.totalorder %s181, %s183
      %p190 = scmp.eq.s32.totalorder %s26, 1
      %p191 = por %p189, %p190
      %p192 = scmp.ne.s32.totalorder %s183, %s184
      %p193 = scmp.eq.s32.totalorder %s26, 0
      %p194 = por %p192, %p193
      %p195 = scmp.ne.s32.totalorder %s183, %s184
      %p196 = scmp.eq.s32.totalorder %s27, 1
      %p197 = por %p195, %p196
      %p199 = scmp.ne.s32.totalorder %s184, %s198
      %p200 = scmp.eq.s32.totalorder %s27, 0
      %p201 = por %p199, %p200
      %s202 = ssub.s32 %s21, %s28
      %p203 = scmp.eq.s32.totalorder %s202, 0
      %s205 = sadd.s32 %s204, 1
      %s206 = scalar_select %p203, %s204, %s205
      %p209 = pneg %p203
      %p210 = scmp.eq.s32.totalorder %s21, 1
      %p211 = por %p209, %p210
      %p212 = scmp.ne.s32.totalorder %s204, %s207
      %p213 = scmp.eq.s32.totalorder %s21, 0
      %p214 = por %p212, %p213
      %p215 = scmp.ne.s32.totalorder %s204, %s207
      %p216 = scmp.eq.s32.totalorder %s26, 1
      %p217 = por %p215, %p216
      %p218 = scmp.ne.s32.totalorder %s207, %s208
      %p219 = scmp.eq.s32.totalorder %s26, 0
      %p220 = por %p218, %p219
      %p221 = scmp.ne.s32.totalorder %s207, %s208
      %p222 = scmp.eq.s32.totalorder %s27, 1
      %p223 = por %p221, %p222
      %p225 = scmp.ne.s32.totalorder %s208, %s224
      %p226 = scmp.eq.s32.totalorder %s27, 0
      %p227 = por %p225, %p226
      %p228 = scmp.le.s32.totalorder 1, %s21
      %p229 = scmp.lt.s32.totalorder %s21, 3
      %p230 = pnand %p228, %p229
      %p231 = pneg %p230
      // Predicated region
      $region9: #{tpu_custom_call.1} parent=5 // pred_check
        _
      $region10: #{tpu_custom_call.1} parent=5 // pred_check_branch
        %233 = sbr.rel (%p230) target = $region12
      $region11: #{tpu_custom_call.1} parent=5 // pred_region
        %s234 = ssub.s32 %s21, 1
        // Predicated region
        $region13: #{tpu_custom_call.1} parent=11 // pred_check
          %p235 = pneg %p68
        $region14: #{tpu_custom_call.1} parent=11 // pred_check_branch
          %237 = sbr.rel (%p235) target = $region16
        $region15: #{tpu_custom_call.1} parent=11 // pred_region
          _
        $region16: #{tpu_custom_call.1} parent=11 // pred_fallthru
          _
        // Predicated region
        $region17: #{tpu_custom_call.1} parent=11 // pred_check
          %p238 = pneg %p89
        $region18: #{tpu_custom_call.1} parent=11 // pred_check_branch
          %240 = sbr.rel (%p238) target = $region20
        $region19: #{tpu_custom_call.1} parent=11 // pred_region
          _
        $region20: #{tpu_custom_call.1} parent=11 // pred_fallthru
          _
        // Predicated region
        $region21: #{tpu_custom_call.1} parent=11 // pred_check
          %p241 = pneg %p110
        $region22: #{tpu_custom_call.1} parent=11 // pred_check_branch
          %243 = sbr.rel (%p241) target = $region24
        $region23: #{tpu_custom_call.1} parent=11 // pred_region
          %s245 = ssub.s32 576, 576
          %246 = vsyncadd [#allocation6], %s245
          %s247 = sshll.u32 [#allocation5], 4
          %s248 = int_to_ptr.vmem [resolvable:$true] %s247
          %253 = dma.hbm_to_vmem [thread:$0]  %s3, 576, %s248, [#allocation6], 64, 64, 4
        $region24: #{tpu_custom_call.1} parent=11 // pred_fallthru
          _
        // Predicated region
        $region25: #{tpu_custom_call.1} parent=11 // pred_check
          %p254 = pneg %p131
        $region26: #{tpu_custom_call.1} parent=11 // pred_check_branch
          %256 = sbr.rel (%p254) target = $region28
        $region27: #{tpu_custom_call.1} parent=11 // pred_region
          %s258 = ssub.s32 4096, 4096
          %259 = vsyncadd [#allocation6], %s258
          %s260 = sshll.u32 [#allocation7], 4
          %s261 = int_to_ptr.vmem [resolvable:$true] %s260
          %266 = dma.hbm_to_vmem [thread:$0]  %s4, 4096, %s261, [#allocation6], 64, 64, 4
        $region28: #{tpu_custom_call.1} parent=11 // pred_fallthru
          _
        // Predicated region
        $region29: #{tpu_custom_call.1} parent=11 // pred_check
          %p267 = pneg %p152
        $region30: #{tpu_custom_call.1} parent=11 // pred_check_branch
          %269 = sbr.rel (%p267) target = $region32
        $region31: #{tpu_custom_call.1} parent=11 // pred_region
          _
        $region32: #{tpu_custom_call.1} parent=11 // pred_fallthru
          _
        // Predicated region
        $region33: #{tpu_custom_call.1} parent=11 // pred_check
          %p270 = pneg %p173
        $region34: #{tpu_custom_call.1} parent=11 // pred_check_branch
          %272 = sbr.rel (%p270) target = $region36
        $region35: #{tpu_custom_call.1} parent=11 // pred_region
          _
        $region36: #{tpu_custom_call.1} parent=11 // pred_fallthru
          _
        // Predicated region
        $region37: #{tpu_custom_call.1} parent=11 // pred_check
          %p273 = pneg %p194
        $region38: #{tpu_custom_call.1} parent=11 // pred_check_branch
          %275 = sbr.rel (%p273) target = $region40
        $region39: #{tpu_custom_call.1} parent=11 // pred_region
          _
        $region40: #{tpu_custom_call.1} parent=11 // pred_fallthru
          _
      $region12: #{tpu_custom_call.1} parent=5 // pred_fallthru
        _
      %p276 = scmp.lt.s32.totalorder %s21, 2
      // Predicated region
      $region41: #{tpu_custom_call.1} parent=5 // pred_check
        %p277 = pneg %p276
      $region42: #{tpu_custom_call.1} parent=5 // pred_check_branch
        %279 = sbr.rel (%p277) target = $region44
      $region43: #{tpu_custom_call.1} parent=5 // pred_region
        // Predicated region
        $region45: #{tpu_custom_call.1} parent=43 // pred_check
          %p280 = pneg %p41
        $region46: #{tpu_custom_call.1} parent=43 // pred_check_branch
          %282 = sbr.rel (%p280) target = $region48
        $region47: #{tpu_custom_call.1} parent=43 // pred_region
          %s283 = sand.u32 %s31, 1
          %s284 = scalar_lea.sflag [#allocation3], %s283
          %s285 = sand.u32 %s31, 1
          %s286 = smul.addr %s285, 32
          %s287 = scalar_lea.vmem [#allocation2], %s286
          %s289 = ssub.s32 512, 512
          %290 = vsyncadd %s284, %s289
          %s291 = smul.addr %s21, 4
          %s292 = smul.addr %s291, 128
          %s293 = scalar_lea.hbm %s0, %s292
          %s295 = sshll.u32 %s287, 4
          %s296 = int_to_ptr.vmem [resolvable:$true] %s295
          %298 = dma.hbm_to_vmem [thread:$0]  %s293, 512, %s296, %s284
        $region48: #{tpu_custom_call.1} parent=43 // pred_fallthru
          _
      $region44: #{tpu_custom_call.1} parent=5 // pred_fallthru
        _
      %p299 = scmp.le.s32.totalorder 1, %s21
      %p300 = scmp.lt.s32.totalorder %s21, 3
      %p301 = pnand %p299, %p300
      %p302 = pneg %p301
      // Predicated region
      $region49: #{tpu_custom_call.1} parent=5 // pred_check
        _
      $region50: #{tpu_custom_call.1} parent=5 // pred_check_branch
        %304 = sbr.rel (%p301) target = $region52
      $region51: #{tpu_custom_call.1} parent=5 // pred_region
        %s305 = ssub.s32 %s21, 1
        %s306 = sand.u32 %s34, 1
        %s307 = scalar_lea.sflag [#allocation3], %s306
        %s308 = sand.u32 %s34, 1
        %s309 = smul.addr %s308, 32
        %s310 = scalar_lea.vmem [#allocation2], %s309
        // Predicated region
        $region53: #{tpu_custom_call.1} parent=51 // pred_check
          %p311 = pneg %p47
        $region54: #{tpu_custom_call.1} parent=51 // pred_check_branch
          %313 = sbr.rel (%p311) target = $region56
        $region55: #{tpu_custom_call.1} parent=51 // pred_region
          %314 = dma.done %s307, 512
        $region56: #{tpu_custom_call.1} parent=51 // pred_fallthru
          _
        // Predicated region
        $region57: #{tpu_custom_call.1} parent=51 // pred_check
          %p315 = pneg %p110
        $region58: #{tpu_custom_call.1} parent=51 // pred_check_branch
          %317 = sbr.rel (%p315) target = $region60
        $region59: #{tpu_custom_call.1} parent=51 // pred_region
          %318 = dma.done [#allocation6], 576
        $region60: #{tpu_custom_call.1} parent=51 // pred_fallthru
          _
        // Predicated region
        $region61: #{tpu_custom_call.1} parent=51 // pred_check
          %p319 = pneg %p131
        $region62: #{tpu_custom_call.1} parent=51 // pred_check_branch
          %321 = sbr.rel (%p319) target = $region64
        $region63: #{tpu_custom_call.1} parent=51 // pred_region
          %322 = dma.done [#allocation6], 4096
        $region64: #{tpu_custom_call.1} parent=51 // pred_fallthru
          _
        %s323 = sand.u32 %s34, 1
        %s324 = scalar_lea.sflag [#allocation3], %s323
        %s325 = sand.u32 %s34, 1
        %s326 = smul.addr %s325, 32
        %s327 = scalar_lea.vmem [#allocation2], %s326
        %p328 = pneg %p47
        %p329 = pneg %p44
        %p330 = pneg %p68
        %p331 = pneg %p65
        %p332 = pneg %p89
        %p333 = pneg %p86
        %p334 = pneg %p110
        %p335 = pneg %p107
        %p336 = pneg %p131
        %p337 = pneg %p128
        %p338 = pneg %p152
        %p339 = pneg %p149
        %p340 = pneg %p173
        %p341 = pneg %p170
        %p342 = pneg %p194
        %p343 = pneg %p191
        %p344 = pneg %p220
        %p345 = pneg %p217
        %s346 = sand.u32 %s207, 1
        %s347 = scalar_lea.sflag [#allocation4], %s346
        %s348 = sand.u32 %s207, 1
        %s349 = smul.addr %s348, 4
        %s350 = scalar_lea.vmem [#allocation8], %s349
        %v352 = vld [vmem:[%s1] sm:$0xf]
        %v353 = vld [vmem:[%s2] sm:$0xff]
        %v354 = vld [vmem:[#allocation7] sm:$0xf]
        %v355 = vld [vmem:[#allocation7 + $0x4] sm:$0xf]
        %v356 = vld [vmem:[#allocation7 + $0x8] sm:$0xf]
        %v357 = vld [vmem:[#allocation7 + $0xc] sm:$0xf]
        %v358 = vld [vmem:[#allocation7 + $0x10] sm:$0xf]
        %v359 = vld [vmem:[#allocation7 + $0x14] sm:$0xf]
        %v360 = vld [vmem:[#allocation7 + $0x18] sm:$0xf]
        %v361 = vld [vmem:[#allocation7 + $0x1c] sm:$0xf]
        %v362 = vld [vmem:[#allocation7 + $0x20] sm:$0xf]
        %v363 = vld [vmem:[#allocation7 + $0x24] sm:$0xf]
        %v364 = vld [vmem:[#allocation7 + $0x28] sm:$0xf]
        %v365 = vld [vmem:[#allocation7 + $0x2c] sm:$0xf]
        %v366 = vld [vmem:[#allocation7 + $0x30] sm:$0xf]
        %v367 = vld [vmem:[#allocation7 + $0x34] sm:$0xf]
        %v368 = vld [vmem:[#allocation7 + $0x38] sm:$0xf]
        %v369 = vld [vmem:[#allocation7 + $0x3c] sm:$0xf]
        %v370 = vld [vmem:[#allocation7 + $0x40] sm:$0xf]
        %v371 = vld [vmem:[#allocation7 + $0x44] sm:$0xf]
        %v372 = vld [vmem:[#allocation7 + $0x48] sm:$0xf]
        %v373 = vld [vmem:[#allocation7 + $0x4c] sm:$0xf]
        %v374 = vld [vmem:[#allocation7 + $0x50] sm:$0xf]
        %v375 = vld [vmem:[#allocation7 + $0x54] sm:$0xf]
        %v376 = vld [vmem:[#allocation7 + $0x58] sm:$0xf]
        %v377 = vld [vmem:[#allocation7 + $0x5c] sm:$0xf]
        %v378 = vld [vmem:[#allocation7 + $0x60] sm:$0xf]
        %v379 = vld [vmem:[#allocation7 + $0x64] sm:$0xf]
        %v380 = vld [vmem:[#allocation7 + $0x68] sm:$0xf]
        %v381 = vld [vmem:[#allocation7 + $0x6c] sm:$0xf]
        %v382 = vld [vmem:[#allocation7 + $0x70] sm:$0xf]
        %v383 = vld [vmem:[#allocation7 + $0x74] sm:$0xf]
        %v384 = vld [vmem:[#allocation7 + $0x78] sm:$0xf]
        %v385 = vld [vmem:[#allocation7 + $0x7c] sm:$0xf]
        %v386 = vld [vmem:[#allocation7 + $0x80] sm:$0xf]
        %v387 = vld [vmem:[#allocation7 + $0x84] sm:$0xf]
        %v388 = vld [vmem:[#allocation7 + $0x88] sm:$0xf]
        %v389 = vld [vmem:[#allocation7 + $0x8c] sm:$0xf]
        %v390 = vld [vmem:[#allocation7 + $0x90] sm:$0xf]
        %v391 = vld [vmem:[#allocation7 + $0x94] sm:$0xf]
        %v392 = vld [vmem:[#allocation7 + $0x98] sm:$0xf]
        %v393 = vld [vmem:[#allocation7 + $0x9c] sm:$0xf]
        %v394 = vld [vmem:[#allocation7 + $0xa0] sm:$0xf]
        %v395 = vld [vmem:[#allocation7 + $0xa4] sm:$0xf]
        %v396 = vld [vmem:[#allocation7 + $0xa8] sm:$0xf]
        %v397 = vld [vmem:[#allocation7 + $0xac] sm:$0xf]
        %v398 = vld [vmem:[#allocation7 + $0xb0] sm:$0xf]
        %v399 = vld [vmem:[#allocation7 + $0xb4] sm:$0xf]
        %v400 = vld [vmem:[#allocation7 + $0xb8] sm:$0xf]
        %v401 = vld [vmem:[#allocation7 + $0xbc] sm:$0xf]
        %v402 = vld [vmem:[#allocation7 + $0xc0] sm:$0xf]
        %v403 = vld [vmem:[#allocation7 + $0xc4] sm:$0xf]
        %v404 = vld [vmem:[#allocation7 + $0xc8] sm:$0xf]
        %v405 = vld [vmem:[#allocation7 + $0xcc] sm:$0xf]
        %v406 = vld [vmem:[#allocation7 + $0xd0] sm:$0xf]
        %v407 = vld [vmem:[#allocation7 + $0xd4] sm:$0xf]
        %v408 = vld [vmem:[#allocation7 + $0xd8] sm:$0xf]
        %v409 = vld [vmem:[#allocation7 + $0xdc] sm:$0xf]
        %v410 = vld [vmem:[#allocation7 + $0xe0] sm:$0xf]
        %v411 = vld [vmem:[#allocation7 + $0xe4] sm:$0xf]
        %v412 = vld [vmem:[#allocation7 + $0xe8] sm:$0xf]
        %v413 = vld [vmem:[#allocation7 + $0xec] sm:$0xf]
        %v414 = vld [vmem:[#allocation7 + $0xf0] sm:$0xf]
        %v415 = vld [vmem:[#allocation7 + $0xf4] sm:$0xf]
        %v416 = vld [vmem:[#allocation7 + $0xf8] sm:$0xf]
        %v417 = vld [vmem:[#allocation7 + $0xfc] sm:$0xf]
        %v418 = vld [vmem:[%s310] sm:$0xff]
        %v419 = vld [vmem:[%s310 + $0x8] sm:$0xff]
        %v420 = vld [vmem:[%s310 + $0x10] sm:$0xff]
        %v421 = vld [vmem:[%s310 + $0x18] sm:$0xff]
        %v422 = vld [vmem:[#allocation5] sm:$0xf]
        %s423 = scalar_lea.vmem [#allocation5], 4
        %v424 = vld [vmem:[%s423] sm:$0xf]
        %s425 = scalar_lea.vmem [#allocation5], 8
        %v426 = vld [vmem:[%s425] sm:$0xf]
        %s427 = scalar_lea.vmem [#allocation5], 12
        %v428 = vld [vmem:[%s427] sm:$0xf]
        %s429 = scalar_lea.vmem [#allocation5], 20
        %v430 = vld [vmem:[%s429] sm:$0xf]
        %s431 = scalar_lea.vmem [#allocation5], 24
        %v432 = vld [vmem:[%s431] sm:$0xf]
        %s433 = scalar_lea.vmem [#allocation5], 28
        %v434 = vld [vmem:[%s433] sm:$0xf]
        %s435 = scalar_lea.vmem [#allocation5], 32
        %v436 = vld [vmem:[%s435] sm:$0xf]
        %438 = vrot.lane.b32.xlu0 %v421, 17
        %v439 = vpop.permute.xlu0 %438
        %444 = vrot.lane.b32.xlu0 %v418, 17
        %v445 = vpop.permute.xlu0 %444
        %446 = vrot.lane.b32.xlu0 %v419, 17
        %v447 = vpop.permute.xlu0 %446
        %448 = vrot.lane.b32.xlu0 %v420, 17
        %v449 = vpop.permute.xlu0 %448
        %vm450 = vcmask 138240
        %v451 = vsel %vm450, %v445, %v447
        %v452 = vsel %vm450, %v447, %v449
        %v453 = vsel %vm450, %v449, %v439
        %v458 = vsel %vm450, %v439, %v445
        %v460 = vlaneseq
        %v461 = vshrl.u32 %v460, 7
        %v462 = vsub.s32 0, %v461
        %v463 = vrot.slane %v422, %v462
        %v464 = vlaneseq
        %v465 = vshrl.u32 %v464, 7
        %v466 = vsub.s32 1, %v465
        %v467 = vrot.slane %v422, %v466
        %v468 = vlaneseq
        %v469 = vshrl.u32 %v468, 7
        %v470 = vsub.s32 2, %v469
        %v471 = vrot.slane %v422, %v470
        %v472 = vlaneseq
        %v473 = vshrl.u32 %v472, 7
        %v474 = vsub.s32 3, %v473
        %v475 = vrot.slane %v422, %v474
        %v480 = vmul.f32 %v458, %v463
        %v481 = vmul.f32 %v451, %v467
        %v482 = vmul.f32 %v452, %v471
        %v483 = vmul.f32 %v453, %v475
        %484 = vrot.lane.b32.xlu0 %v421, 16
        %v485 = vpop.permute.xlu0 %484
        %487 = vrot.lane.b32.xlu0 %v418, 16
        %v488 = vpop.permute.xlu0 %487
        %489 = vrot.lane.b32.xlu0 %v419, 16
        %v490 = vpop.permute.xlu0 %489
        %491 = vrot.lane.b32.xlu0 %v420, 16
        %v492 = vpop.permute.xlu0 %491
        %vm493 = vcmask 130048
        %v494 = vsel %vm493, %v488, %v490
        %v495 = vsel %vm493, %v490, %v492
        %v496 = vsel %vm493, %v492, %v485
        %v501 = vsel %vm493, %v485, %v488
        %v503 = vlaneseq
        %v504 = vshrl.u32 %v503, 7
        %v505 = vsub.s32 0, %v504
        %v506 = vrot.slane %v424, %v505
        %v507 = vlaneseq
        %v508 = vshrl.u32 %v507, 7
        %v509 = vsub.s32 1, %v508
        %v510 = vrot.slane %v424, %v509
        %v511 = vlaneseq
        %v512 = vshrl.u32 %v511, 7
        %v513 = vsub.s32 2, %v512
        %v514 = vrot.slane %v424, %v513
        %v515 = vlaneseq
        %v516 = vshrl.u32 %v515, 7
        %v517 = vsub.s32 3, %v516
        %v518 = vrot.slane %v424, %v517
        %v523 = vmul.f32 %v501, %v506
        %v524 = vmul.f32 %v494, %v510
        %v525 = vmul.f32 %v495, %v514
        %v526 = vmul.f32 %v496, %v518
        %527 = vrot.lane.b32.xlu0 %v421, 15
        %v528 = vpop.permute.xlu0 %527
        %530 = vrot.lane.b32.xlu0 %v418, 15
        %v531 = vpop.permute.xlu0 %530
        %532 = vrot.lane.b32.xlu0 %v419, 15
        %v533 = vpop.permute.xlu0 %532
        %534 = vrot.lane.b32.xlu0 %v420, 15
        %v535 = vpop.permute.xlu0 %534
        %vm536 = vcmask 121856
        %v537 = vsel %vm536, %v531, %v533
        %v538 = vsel %vm536, %v533, %v535
        %v539 = vsel %vm536, %v535, %v528
        %v544 = vsel %vm536, %v528, %v531
        %v546 = vlaneseq
        %v547 = vshrl.u32 %v546, 7
        %v548 = vsub.s32 0, %v547
        %v549 = vrot.slane %v426, %v548
        %v550 = vlaneseq
        %v551 = vshrl.u32 %v550, 7
        %v552 = vsub.s32 1, %v551
        %v553 = vrot.slane %v426, %v552
        %v554 = vlaneseq
        %v555 = vshrl.u32 %v554, 7
        %v556 = vsub.s32 2, %v555
        %v557 = vrot.slane %v426, %v556
        %v558 = vlaneseq
        %v559 = vshrl.u32 %v558, 7
        %v560 = vsub.s32 3, %v559
        %v561 = vrot.slane %v426, %v560
        %v566 = vmul.f32 %v544, %v549
        %v567 = vmul.f32 %v537, %v553
        %v568 = vmul.f32 %v538, %v557
        %v569 = vmul.f32 %v539, %v561
        %570 = vrot.lane.b32.xlu0 %v421, 1
        %v571 = vpop.permute.xlu0 %570
        %573 = vrot.lane.b32.xlu0 %v418, 1
        %v574 = vpop.permute.xlu0 %573
        %575 = vrot.lane.b32.xlu0 %v419, 1
        %v576 = vpop.permute.xlu0 %575
        %577 = vrot.lane.b32.xlu0 %v420, 1
        %v578 = vpop.permute.xlu0 %577
        %vm579 = vcmask 7168
        %v580 = vsel %vm579, %v574, %v576
        %v581 = vsel %vm579, %v576, %v578
        %v582 = vsel %vm579, %v578, %v571
        %v587 = vsel %vm579, %v571, %v574
        %v589 = vlaneseq
        %v590 = vshrl.u32 %v589, 7
        %v591 = vsub.s32 0, %v590
        %v592 = vrot.slane %v428, %v591
        %v593 = vlaneseq
        %v594 = vshrl.u32 %v593, 7
        %v595 = vsub.s32 1, %v594
        %v596 = vrot.slane %v428, %v595
        %v597 = vlaneseq
        %v598 = vshrl.u32 %v597, 7
        %v599 = vsub.s32 2, %v598
        %v600 = vrot.slane %v428, %v599
        %v601 = vlaneseq
        %v602 = vshrl.u32 %v601, 7
        %v603 = vsub.s32 3, %v602
        %v604 = vrot.slane %v428, %v603
        %v609 = vmul.f32 %v587, %v592
        %v610 = vmul.f32 %v580, %v596
        %v611 = vmul.f32 %v581, %v600
        %v612 = vmul.f32 %v582, %v604
        %613 = vrot.lane.b32.xlu0 %v418, 127
        %v614 = vpop.permute.xlu0 %613
        %615 = vrot.lane.b32.xlu0 %v419, 127
        %v616 = vpop.permute.xlu0 %615
        %617 = vrot.lane.b32.xlu0 %v420, 127
        %v618 = vpop.permute.xlu0 %617
        %619 = vrot.lane.b32.xlu0 %v421, 127
        %v620 = vpop.permute.xlu0 %619
        %vm621 = vcmask 1039360
        %v622 = vsel %vm621, %v614, %v616
        %v623 = vsel %vm621, %v616, %v618
        %v624 = vsel %vm621, %v618, %v620
        %v630 = vsel %vm621, %v620, %v614
        %v632 = vlaneseq
        %v633 = vshrl.u32 %v632, 7
        %v634 = vsub.s32 0, %v633
        %v635 = vrot.slane %v430, %v634
        %v636 = vlaneseq
        %v637 = vshrl.u32 %v636, 7
        %v638 = vsub.s32 1, %v637
        %v639 = vrot.slane %v430, %v638
        %v640 = vlaneseq
        %v641 = vshrl.u32 %v640, 7
        %v642 = vsub.s32 2, %v641
        %v643 = vrot.slane %v430, %v642
        %v644 = vlaneseq
        %v645 = vshrl.u32 %v644, 7
        %v646 = vsub.s32 3, %v645
        %v647 = vrot.slane %v430, %v646
        %v652 = vmul.f32 %v622, %v635
        %v653 = vmul.f32 %v623, %v639
        %v654 = vmul.f32 %v624, %v643
        %v655 = vmul.f32 %v630, %v647
        %656 = vrot.lane.b32.xlu0 %v418, 113
        %v657 = vpop.permute.xlu0 %656
        %658 = vrot.lane.b32.xlu0 %v419, 113
        %v659 = vpop.permute.xlu0 %658
        %660 = vrot.lane.b32.xlu0 %v420, 113
        %v661 = vpop.permute.xlu0 %660
        %662 = vrot.lane.b32.xlu0 %v421, 113
        %v663 = vpop.permute.xlu0 %662
        %vm664 = vcmask 924672
        %v665 = vsel %vm664, %v657, %v659
        %v666 = vsel %vm664, %v659, %v661
        %v667 = vsel %vm664, %v661, %v663
        %v673 = vsel %vm664, %v663, %v657
        %v675 = vlaneseq
        %v676 = vshrl.u32 %v675, 7
        %v677 = vsub.s32 0, %v676
        %v678 = vrot.slane %v432, %v677
        %v679 = vlaneseq
        %v680 = vshrl.u32 %v679, 7
        %v681 = vsub.s32 1, %v680
        %v682 = vrot.slane %v432, %v681
        %v683 = vlaneseq
        %v684 = vshrl.u32 %v683, 7
        %v685 = vsub.s32 2, %v684
        %v686 = vrot.slane %v432, %v685
        %v687 = vlaneseq
        %v688 = vshrl.u32 %v687, 7
        %v689 = vsub.s32 3, %v688
        %v690 = vrot.slane %v432, %v689
        %v695 = vmul.f32 %v665, %v678
        %v696 = vmul.f32 %v666, %v682
        %v697 = vmul.f32 %v667, %v686
        %v698 = vmul.f32 %v673, %v690
        %699 = vrot.lane.b32.xlu0 %v418, 112
        %v700 = vpop.permute.xlu0 %699
        %701 = vrot.lane.b32.xlu0 %v419, 112
        %v702 = vpop.permute.xlu0 %701
        %703 = vrot.lane.b32.xlu0 %v420, 112
        %v704 = vpop.permute.xlu0 %703
        %705 = vrot.lane.b32.xlu0 %v421, 112
        %v706 = vpop.permute.xlu0 %705
        %vm707 = vcmask 916480
        %v708 = vsel %vm707, %v700, %v702
        %v709 = vsel %vm707, %v702, %v704
        %v710 = vsel %vm707, %v704, %v706
        %v716 = vsel %vm707, %v706, %v700
        %v718 = vlaneseq
        %v719 = vshrl.u32 %v718, 7
        %v720 = vsub.s32 0, %v719
        %v721 = vrot.slane %v434, %v720
        %v722 = vlaneseq
        %v723 = vshrl.u32 %v722, 7
        %v724 = vsub.s32 1, %v723
        %v725 = vrot.slane %v434, %v724
        %v726 = vlaneseq
        %v727 = vshrl.u32 %v726, 7
        %v728 = vsub.s32 2, %v727
        %v729 = vrot.slane %v434, %v728
        %v730 = vlaneseq
        %v731 = vshrl.u32 %v730, 7
        %v732 = vsub.s32 3, %v731
        %v733 = vrot.slane %v434, %v732
        %v738 = vmul.f32 %v708, %v721
        %v739 = vmul.f32 %v709, %v725
        %v740 = vmul.f32 %v710, %v729
        %v741 = vmul.f32 %v716, %v733
        %742 = vrot.lane.b32.xlu0 %v418, 111
        %v743 = vpop.permute.xlu0 %742
        %744 = vrot.lane.b32.xlu0 %v419, 111
        %v745 = vpop.permute.xlu0 %744
        %746 = vrot.lane.b32.xlu0 %v420, 111
        %v747 = vpop.permute.xlu0 %746
        %748 = vrot.lane.b32.xlu0 %v421, 111
        %v749 = vpop.permute.xlu0 %748
        %vm750 = vcmask 908288
        %v751 = vsel %vm750, %v743, %v745
        %v752 = vsel %vm750, %v745, %v747
        %v753 = vsel %vm750, %v747, %v749
        %v759 = vsel %vm750, %v749, %v743
        %v761 = vlaneseq
        %v762 = vshrl.u32 %v761, 7
        %v763 = vsub.s32 0, %v762
        %v764 = vrot.slane %v436, %v763
        %v765 = vlaneseq
        %v766 = vshrl.u32 %v765, 7
        %v767 = vsub.s32 1, %v766
        %v768 = vrot.slane %v436, %v767
        %v769 = vlaneseq
        %v770 = vshrl.u32 %v769, 7
        %v771 = vsub.s32 2, %v770
        %v772 = vrot.slane %v436, %v771
        %v773 = vlaneseq
        %v774 = vshrl.u32 %v773, 7
        %v775 = vsub.s32 3, %v774
        %v776 = vrot.slane %v436, %v775
        %v781 = vmul.f32 %v751, %v764
        %v782 = vmul.f32 %v752, %v768
        %v783 = vmul.f32 %v753, %v772
        %v784 = vmul.f32 %v759, %v776
        %v785 = vpack.c.bf16 %v523, %v480
        %v786 = vpack.c.bf16 %v524, %v481
        %v787 = vpack.c.bf16 %v525, %v482
        %v788 = vpack.c.bf16 %v526, %v483
        %v789 = vpack.c.bf16 %v609, %v566
        %v790 = vpack.c.bf16 %v610, %v567
        %v791 = vpack.c.bf16 %v611, %v568
        %v792 = vpack.c.bf16 %v612, %v569
        %v793 = vpack.c.bf16 %v652, %v418
        %v794 = vpack.c.bf16 %v653, %v419
        %v795 = vpack.c.bf16 %v654, %v420
        %v796 = vpack.c.bf16 %v655, %v421
        %v797 = vpack.c.bf16 %v738, %v695
        %v798 = vpack.c.bf16 %v739, %v696
        %v799 = vpack.c.bf16 %v740, %v697
        %v800 = vpack.c.bf16 %v741, %v698
        %v801 = vpack.c.bf16 %v781, %v781
        %v802 = vpack.c.bf16 %v782, %v782
        %v803 = vpack.c.bf16 %v783, %v783
        %v804 = vpack.c.bf16 %v784, %v784
        %806 = vset.pattern.permute.xlu0 0
        %807 = vperm.xlu0 %806, %v353
        %v808 = vpop.permute.xlu0 %807
        %vm810 = vcmask 588800
        %v812 = vsel %vm810, %v352, 0
        %vm814 = vcmask 1043456
        %v816 = vsel %vm814, %v801, 0
        %v819 = vsel %vm814, %v802, 0
        %v822 = vsel %vm814, %v803, 0
        %v825 = vsel %vm814, %v804, 0
        %827 = vmatprep.subr.bf16.mxu0 0
        %828 = vmatpush1.bf16.msra.mxu0 0
        %829 = vmatprep.subr.bf16.mxu0 0
        %830 = vmatpush1.bf16.msra.mxu0 0
        %831 = vmatprep.subr.bf16.mxu0 0
        %832 = vmatpush1.bf16.msra.mxu0 0
        %833 = vmatprep.subr.bf16.mxu0 %v819
        %834 = vmatpush1.bf16.msra.mxu0 %v816
        %835 = vmatprep.subr.bf16.mxu0 %v798
        %836 = vmatpush1.bf16.msra.mxu0 %v797
        %837 = vmatprep.subr.bf16.mxu0 %v794
        %838 = vmatpush1.bf16.msra.mxu0 %v793
        %839 = vmatprep.subr.bf16.mxu0 %v790
        %840 = vmatpush1.bf16.msra.mxu0 %v789
        %841 = vmatprep.subr.bf16.mxu0 %v786
        %842 = vmatpush1.bf16.msra.mxu0 %v785
        %843 = vmatprep.subr.bf16.mxu0 0
        %844 = vmatpush2.bf16.msra.mxu0 0
        %845 = vmatprep.subr.bf16.mxu0 0
        %846 = vmatpush2.bf16.msra.mxu0 0
        %847 = vmatprep.subr.bf16.mxu0 0
        %848 = vmatpush2.bf16.msra.mxu0 0
        %849 = vmatprep.subr.bf16.mxu0 0
        %850 = vmatpush2.bf16.msra.mxu0 0
        %851 = vmatprep.subr.bf16.mxu0 0
        %852 = vmatpush2.bf16.msra.mxu0 0
        %853 = vmatprep.subr.bf16.mxu0 0
        %854 = vmatpush2.bf16.msra.mxu0 0
        %855 = vmatprep.subr.bf16.mxu0 0
        %856 = vmatpush2.bf16.msra.mxu0 0
        %857 = vmatprep.subr.bf16.mxu0 0
        %858 = vmatpush2.bf16.msra.mxu0 0
        %859 = vmatprep.mubr.bf16.mxu0 0
        %860 = vmatmul.mubr.bf16.gmra.mxu0 %v812
        %v861 = vpop.f32.mrf.mxu0
        %v862 = vadd.f32 %v808, %v861
        %v863 = vpop.f32.mrf.mxu0
        %v864 = vadd.f32 %v808, %v863
        %v865 = vpop.f32.mrf.mxu0
        %v866 = vpop.f32.mrf.mxu0
        %867 = vdwg.mxu0
        %868 = vmatprep.subr.bf16.mxu0 0
        %869 = vmatpush1.bf16.msra.mxu0 0
        %870 = vmatprep.subr.bf16.mxu0 0
        %871 = vmatpush1.bf16.msra.mxu0 0
        %872 = vmatprep.subr.bf16.mxu0 0
        %873 = vmatpush1.bf16.msra.mxu0 0
        %874 = vmatprep.subr.bf16.mxu0 %v825
        %875 = vmatpush1.bf16.msra.mxu0 %v822
        %876 = vmatprep.subr.bf16.mxu0 %v800
        %877 = vmatpush1.bf16.msra.mxu0 %v799
        %878 = vmatprep.subr.bf16.mxu0 %v796
        %879 = vmatpush1.bf16.msra.mxu0 %v795
        %880 = vmatprep.subr.bf16.mxu0 %v792
        %881 = vmatpush1.bf16.msra.mxu0 %v791
        %882 = vmatprep.subr.bf16.mxu0 %v788
        %883 = vmatpush1.bf16.msra.mxu0 %v787
        %884 = vmatprep.subr.bf16.mxu0 0
        %885 = vmatpush2.bf16.msra.mxu0 0
        %886 = vmatprep.subr.bf16.mxu0 0
        %887 = vmatpush2.bf16.msra.mxu0 0
        %888 = vmatprep.subr.bf16.mxu0 0
        %889 = vmatpush2.bf16.msra.mxu0 0
        %890 = vmatprep.subr.bf16.mxu0 0
        %891 = vmatpush2.bf16.msra.mxu0 0
        %892 = vmatprep.subr.bf16.mxu0 0
        %893 = vmatpush2.bf16.msra.mxu0 0
        %894 = vmatprep.subr.bf16.mxu0 0
        %895 = vmatpush2.bf16.msra.mxu0 0
        %896 = vmatprep.subr.bf16.mxu0 0
        %897 = vmatpush2.bf16.msra.mxu0 0
        %898 = vmatprep.subr.bf16.mxu0 0
        %899 = vmatpush2.bf16.msra.mxu0 0
        %900 = vmatprep.mubr.bf16.mxu0 0
        %901 = vmatmul.mubr.bf16.gmra.mxu0 %v812
        %v902 = vpop.f32.mrf.mxu0
        %v903 = vadd.f32 %v808, %v902
        %v904 = vpop.f32.mrf.mxu0
        %v905 = vadd.f32 %v808, %v904
        %v906 = vpop.f32.mrf.mxu0
        %v907 = vpop.f32.mrf.mxu0
        %908 = vdwg.mxu0
        %v909 = vmax.f32 %v862, 0.0
        %v910 = vmax.f32 %v864, 0.0
        %v911 = vmax.f32 %v903, 0.0
        %v912 = vmax.f32 %v905, 0.0
        %v913 = vpack.c.bf16 %v909, %v909
        %v914 = vpack.c.bf16 %v910, %v910
        %v915 = vpack.c.bf16 %v911, %v911
        %v916 = vpack.c.bf16 %v912, %v912
        %v981 = vunpack.c.l.b16 %v354
        %v982 = vunpack.c.l.b16 %v355
        %v983 = vunpack.c.l.b16 %v356
        %v984 = vunpack.c.l.b16 %v357
        %v985 = vunpack.c.l.b16 %v358
        %v986 = vunpack.c.l.b16 %v359
        %v987 = vunpack.c.l.b16 %v360
        %v988 = vunpack.c.l.b16 %v361
        %v989 = vunpack.c.l.b16 %v362
        %v990 = vunpack.c.l.b16 %v363
        %v991 = vunpack.c.l.b16 %v364
        %v992 = vunpack.c.l.b16 %v365
        %v993 = vunpack.c.l.b16 %v366
        %v994 = vunpack.c.l.b16 %v367
        %v995 = vunpack.c.l.b16 %v368
        %v996 = vunpack.c.l.b16 %v369
        %v997 = vunpack.c.l.b16 %v370
        %v998 = vunpack.c.l.b16 %v371
        %v999 = vunpack.c.l.b16 %v372
        %v1000 = vunpack.c.l.b16 %v373
        %v1001 = vunpack.c.l.b16 %v374
        %v1002 = vunpack.c.l.b16 %v375
        %v1003 = vunpack.c.l.b16 %v376
        %v1004 = vunpack.c.l.b16 %v377
        %v1005 = vunpack.c.l.b16 %v378
        %v1006 = vunpack.c.l.b16 %v379
        %v1007 = vunpack.c.l.b16 %v380
        %v1008 = vunpack.c.l.b16 %v381
        %v1009 = vunpack.c.l.b16 %v382
        %v1010 = vunpack.c.l.b16 %v383
        %v1011 = vunpack.c.l.b16 %v384
        %v1012 = vunpack.c.l.b16 %v385
        %v1013 = vunpack.c.l.b16 %v386
        %v1014 = vunpack.c.l.b16 %v387
        %v1015 = vunpack.c.l.b16 %v388
        %v1016 = vunpack.c.l.b16 %v389
        %v1017 = vunpack.c.l.b16 %v390
        %v1018 = vunpack.c.l.b16 %v391
        %v1019 = vunpack.c.l.b16 %v392
        %v1020 = vunpack.c.l.b16 %v393
        %v1021 = vunpack.c.l.b16 %v394
        %v1022 = vunpack.c.l.b16 %v395
        %v1023 = vunpack.c.l.b16 %v396
        %v1024 = vunpack.c.l.b16 %v397
        %v1025 = vunpack.c.l.b16 %v398
        %v1026 = vunpack.c.l.b16 %v399
        %v1027 = vunpack.c.l.b16 %v400
        %v1028 = vunpack.c.l.b16 %v401
        %v1029 = vunpack.c.l.b16 %v402
        %v1030 = vunpack.c.l.b16 %v403
        %v1031 = vunpack.c.l.b16 %v404
        %v1032 = vunpack.c.l.b16 %v405
        %v1033 = vunpack.c.l.b16 %v406
        %v1034 = vunpack.c.l.b16 %v407
        %v1035 = vunpack.c.l.b16 %v408
        %v1036 = vunpack.c.l.b16 %v409
        %v1037 = vunpack.c.l.b16 %v410
        %v1038 = vunpack.c.l.b16 %v411
        %v1039 = vunpack.c.l.b16 %v412
        %v1040 = vunpack.c.l.b16 %v413
        %v1041 = vunpack.c.l.b16 %v414
        %v1042 = vunpack.c.l.b16 %v415
        %v1043 = vunpack.c.l.b16 %v416
        %v1044 = vunpack.c.l.b16 %v417
        %v1045 = vpack.c.b16 %v982, %v981
        %v1046 = vpack.c.b16 %v984, %v983
        %v1047 = vpack.c.b16 %v986, %v985
        %v1048 = vpack.c.b16 %v988, %v987
        %v1049 = vpack.c.b16 %v990, %v989
        %v1050 = vpack.c.b16 %v992, %v991
        %v1051 = vpack.c.b16 %v994, %v993
        %v1052 = vpack.c.b16 %v996, %v995
        %v1053 = vpack.c.b16 %v998, %v997
        %v1054 = vpack.c.b16 %v1000, %v999
        %v1055 = vpack.c.b16 %v1002, %v1001
        %v1056 = vpack.c.b16 %v1004, %v1003
        %v1057 = vpack.c.b16 %v1006, %v1005
        %v1058 = vpack.c.b16 %v1008, %v1007
        %v1059 = vpack.c.b16 %v1010, %v1009
        %v1060 = vpack.c.b16 %v1012, %v1011
        %v1061 = vpack.c.b16 %v1014, %v1013
        %v1062 = vpack.c.b16 %v1016, %v1015
        %v1063 = vpack.c.b16 %v1018, %v1017
        %v1064 = vpack.c.b16 %v1020, %v1019
        %v1065 = vpack.c.b16 %v1022, %v1021
        %v1066 = vpack.c.b16 %v1024, %v1023
        %v1067 = vpack.c.b16 %v1026, %v1025
        %v1068 = vpack.c.b16 %v1028, %v1027
        %v1069 = vpack.c.b16 %v1030, %v1029
        %v1070 = vpack.c.b16 %v1032, %v1031
        %v1071 = vpack.c.b16 %v1034, %v1033
        %v1072 = vpack.c.b16 %v1036, %v1035
        %v1073 = vpack.c.b16 %v1038, %v1037
        %v1074 = vpack.c.b16 %v1040, %v1039
        %v1075 = vpack.c.b16 %v1042, %v1041
        %v1076 = vpack.c.b16 %v1044, %v1043
        %1109 = vmatprep.subr.bf16.mxu0 0
        %1110 = vmatpush1.bf16.msra.mxu0 %v1052
        %1111 = vmatprep.subr.bf16.mxu0 0
        %1112 = vmatpush1.bf16.msra.mxu0 %v1051
        %1113 = vmatprep.subr.bf16.mxu0 0
        %1114 = vmatpush1.bf16.msra.mxu0 %v1050
        %1115 = vmatprep.subr.bf16.mxu0 0
        %1116 = vmatpush1.bf16.msra.mxu0 %v1049
        %1117 = vmatprep.subr.bf16.mxu0 0
        %1118 = vmatpush1.bf16.msra.mxu0 %v1048
        %1119 = vmatprep.subr.bf16.mxu0 0
        %1120 = vmatpush1.bf16.msra.mxu0 %v1047
        %1121 = vmatprep.subr.bf16.mxu0 0
        %1122 = vmatpush1.bf16.msra.mxu0 %v1046
        %1123 = vmatprep.subr.bf16.mxu0 0
        %1124 = vmatpush1.bf16.msra.mxu0 %v1045
        %1125 = vmatprep.subr.bf16.mxu0 0
        %1126 = vmatpush2.bf16.msra.mxu0 %v1060
        %1127 = vmatprep.subr.bf16.mxu0 0
        %1128 = vmatpush2.bf16.msra.mxu0 %v1059
        %1129 = vmatprep.subr.bf16.mxu0 0
        %1130 = vmatpush2.bf16.msra.mxu0 %v1058
        %1131 = vmatprep.subr.bf16.mxu0 0
        %1132 = vmatpush2.bf16.msra.mxu0 %v1057
        %1133 = vmatprep.subr.bf16.mxu0 0
        %1134 = vmatpush2.bf16.msra.mxu0 %v1056
        %1135 = vmatprep.subr.bf16.mxu0 0
        %1136 = vmatpush2.bf16.msra.mxu0 %v1055
        %1137 = vmatprep.subr.bf16.mxu0 0
        %1138 = vmatpush2.bf16.msra.mxu0 %v1054
        %1139 = vmatprep.subr.bf16.mxu0 0
        %1140 = vmatpush2.bf16.msra.mxu0 %v1053
        %1141 = vmatprep.mubr.bf16.mxu0 %v914
        %1142 = vmatmul.mubr.bf16.gmra.mxu0 %v913
        %v1143 = vpop.f32.mrf.mxu0
        %v1144 = vadd.f32 0.0, %v1143
        %v1145 = vpop.f32.mrf.mxu0
        %v1146 = vpop.f32.mrf.mxu0
        %v1147 = vpop.f32.mrf.mxu0
        %1148 = vdwg.mxu0
        %1149 = vmatprep.subr.bf16.mxu0 0
        %1150 = vmatpush1.bf16.msra.mxu0 %v1068
        %1151 = vmatprep.subr.bf16.mxu0 0
        %1152 = vmatpush1.bf16.msra.mxu0 %v1067
        %1153 = vmatprep.subr.bf16.mxu0 0
        %1154 = vmatpush1.bf16.msra.mxu0 %v1066
        %1155 = vmatprep.subr.bf16.mxu0 0
        %1156 = vmatpush1.bf16.msra.mxu0 %v1065
        %1157 = vmatprep.subr.bf16.mxu0 0
        %1158 = vmatpush1.bf16.msra.mxu0 %v1064
        %1159 = vmatprep.subr.bf16.mxu0 0
        %1160 = vmatpush1.bf16.msra.mxu0 %v1063
        %1161 = vmatprep.subr.bf16.mxu0 0
        %1162 = vmatpush1.bf16.msra.mxu0 %v1062
        %1163 = vmatprep.subr.bf16.mxu0 0
        %1164 = vmatpush1.bf16.msra.mxu0 %v1061
        %1165 = vmatprep.subr.bf16.mxu0 0
        %1166 = vmatpush2.bf16.msra.mxu0 %v1076
        %1167 = vmatprep.subr.bf16.mxu0 0
        %1168 = vmatpush2.bf16.msra.mxu0 %v1075
        %1169 = vmatprep.subr.bf16.mxu0 0
        %1170 = vmatpush2.bf16.msra.mxu0 %v1074
        %1171 = vmatprep.subr.bf16.mxu0 0
        %1172 = vmatpush2.bf16.msra.mxu0 %v1073
        %1173 = vmatprep.subr.bf16.mxu0 0
        %1174 = vmatpush2.bf16.msra.mxu0 %v1072
        %1175 = vmatprep.subr.bf16.mxu0 0
        %1176 = vmatpush2.bf16.msra.mxu0 %v1071
        %1177 = vmatprep.subr.bf16.mxu0 0
        %1178 = vmatpush2.bf16.msra.mxu0 %v1070
        %1179 = vmatprep.subr.bf16.mxu0 0
        %1180 = vmatpush2.bf16.msra.mxu0 %v1069
        %1181 = vmatprep.mubr.bf16.mxu0 %v916
        %1182 = vmatmul.mubr.bf16.gmra.mxu0 %v915
        %v1183 = vpop.f32.mrf.mxu0
        %v1184 = vadd.f32 %v1144, %v1183
        %v1185 = vpop.f32.mrf.mxu0
        %v1186 = vpop.f32.mrf.mxu0
        %v1187 = vpop.f32.mrf.mxu0
        %1188 = vdwg.mxu0
        %v1189 = vld [vmem:[%s5] sm:$0x1]
        %s1190 = scalar_lea.vmem %s5, 1
        %v1191 = vld [vmem:[%s1190] sm:$0x1]
        %s1192 = scalar_lea.vmem %s5, 2
        %v1193 = vld [vmem:[%s1192] sm:$0x1]
        %s1194 = scalar_lea.vmem %s5, 3
        %v1195 = vld [vmem:[%s1194] sm:$0x1]
        %s1196 = scalar_lea.vmem %s5, 5
        %v1197 = vld [vmem:[%s1196] sm:$0x1]
        %s1198 = scalar_lea.vmem %s5, 6
        %v1199 = vld [vmem:[%s1198] sm:$0x1]
        %s1200 = scalar_lea.vmem %s5, 7
        %v1201 = vld [vmem:[%s1200] sm:$0x1]
        %s1202 = scalar_lea.vmem %s5, 8
        %v1203 = vld [vmem:[%s1202] sm:$0x1]
        %v1204 = vld [vmem:[%s6] sm:$0xf]
        %v1205 = vld [vmem:[%s7] sm:$0xff]
        %1207 = vrot.lane.b32.xlu0 %v1184, 9
        %v1208 = vpop.permute.xlu0 %1207
        %v1211 = vlaneseq
        %v1212 = vshrl.u32 %v1211, 7
        %v1213 = vsub.s32 0, %v1212
        %v1214 = vrot.slane %v1189, %v1213
        %v1216 = vmul.f32 %v1208, %v1214
        %1217 = vrot.lane.b32.xlu0 %v1184, 8
        %v1218 = vpop.permute.xlu0 %1217
        %v1221 = vlaneseq
        %v1222 = vshrl.u32 %v1221, 7
        %v1223 = vsub.s32 0, %v1222
        %v1224 = vrot.slane %v1191, %v1223
        %v1226 = vmul.f32 %v1218, %v1224
        %1227 = vrot.lane.b32.xlu0 %v1184, 7
        %v1228 = vpop.permute.xlu0 %1227
        %v1231 = vlaneseq
        %v1232 = vshrl.u32 %v1231, 7
        %v1233 = vsub.s32 0, %v1232
        %v1234 = vrot.slane %v1193, %v1233
        %v1236 = vmul.f32 %v1228, %v1234
        %1237 = vrot.lane.b32.xlu0 %v1184, 1
        %v1238 = vpop.permute.xlu0 %1237
        %v1241 = vlaneseq
        %v1242 = vshrl.u32 %v1241, 7
        %v1243 = vsub.s32 0, %v1242
        %v1244 = vrot.slane %v1195, %v1243
        %v1246 = vmul.f32 %v1238, %v1244
        %1247 = vrot.lane.b32.xlu0 %v1184, 127
        %v1248 = vpop.permute.xlu0 %1247
        %v1251 = vlaneseq
        %v1252 = vshrl.u32 %v1251, 7
        %v1253 = vsub.s32 0, %v1252
        %v1254 = vrot.slane %v1197, %v1253
        %v1256 = vmul.f32 %v1248, %v1254
        %1257 = vrot.lane.b32.xlu0 %v1184, 121
        %v1258 = vpop.permute.xlu0 %1257
        %v1261 = vlaneseq
        %v1262 = vshrl.u32 %v1261, 7
        %v1263 = vsub.s32 0, %v1262
        %v1264 = vrot.slane %v1199, %v1263
        %v1266 = vmul.f32 %v1258, %v1264
        %1267 = vrot.lane.b32.xlu0 %v1184, 120
        %v1268 = vpop.permute.xlu0 %1267
        %v1271 = vlaneseq
        %v1272 = vshrl.u32 %v1271, 7
        %v1273 = vsub.s32 0, %v1272
        %v1274 = vrot.slane %v1201, %v1273
        %v1276 = vmul.f32 %v1268, %v1274
        %1277 = vrot.lane.b32.xlu0 %v1184, 119
        %v1278 = vpop.permute.xlu0 %1277
        %v1281 = vlaneseq
        %v1282 = vshrl.u32 %v1281, 7
        %v1283 = vsub.s32 0, %v1282
        %v1284 = vrot.slane %v1203, %v1283
        %v1286 = vmul.f32 %v1278, %v1284
        %v1287 = vpack.c.bf16 %v1226, %v1216
        %v1288 = vpack.c.bf16 %v1246, %v1236
        %v1289 = vpack.c.bf16 %v1256, %v1184
        %v1290 = vpack.c.bf16 %v1276, %v1266
        %v1291 = vpack.c.bf16 %v1286, %v1286
        %1293 = vset.pattern.permute.xlu0 0
        %1294 = vperm.xlu0 %1293, %v1205
        %v1295 = vpop.permute.xlu0 %1294
        %v1298 = vsel %vm810, %v1204, 0
        %v1301 = vsel %vm814, %v1291, 0
        %1303 = vmatprep.subr.bf16.mxu0 0
        %1304 = vmatpush1.bf16.msra.mxu0 0
        %1305 = vmatprep.subr.bf16.mxu0 0
        %1306 = vmatpush1.bf16.msra.mxu0 0
        %1307 = vmatprep.subr.bf16.mxu0 0
        %1308 = vmatpush1.bf16.msra.mxu0 0
        %1309 = vmatprep.subr.bf16.mxu0 0
        %1310 = vmatpush1.bf16.msra.mxu0 %v1301
        %1311 = vmatprep.subr.bf16.mxu0 0
        %1312 = vmatpush1.bf16.msra.mxu0 %v1290
        %1313 = vmatprep.subr.bf16.mxu0 0
        %1314 = vmatpush1.bf16.msra.mxu0 %v1289
        %1315 = vmatprep.subr.bf16.mxu0 0
        %1316 = vmatpush1.bf16.msra.mxu0 %v1288
        %1317 = vmatprep.subr.bf16.mxu0 0
        %1318 = vmatpush1.bf16.msra.mxu0 %v1287
        %1319 = vmatprep.subr.bf16.mxu0 0
        %1320 = vmatpush2.bf16.msra.mxu0 0
        %1321 = vmatprep.subr.bf16.mxu0 0
        %1322 = vmatpush2.bf16.msra.mxu0 0
        %1323 = vmatprep.subr.bf16.mxu0 0
        %1324 = vmatpush2.bf16.msra.mxu0 0
        %1325 = vmatprep.subr.bf16.mxu0 0
        %1326 = vmatpush2.bf16.msra.mxu0 0
        %1327 = vmatprep.subr.bf16.mxu0 0
        %1328 = vmatpush2.bf16.msra.mxu0 0
        %1329 = vmatprep.subr.bf16.mxu0 0
        %1330 = vmatpush2.bf16.msra.mxu0 0
        %1331 = vmatprep.subr.bf16.mxu0 0
        %1332 = vmatpush2.bf16.msra.mxu0 0
        %1333 = vmatprep.subr.bf16.mxu0 0
        %1334 = vmatpush2.bf16.msra.mxu0 0
        %1335 = vmatprep.mubr.bf16.mxu0 0
        %1336 = vmatmul.mubr.bf16.gmra.mxu0 %v1298
        %v1337 = vpop.f32.mrf.mxu0
        %v1338 = vadd.f32 %v1295, %v1337
        %v1339 = vpop.f32.mrf.mxu0
        %v1340 = vpop.f32.mrf.mxu0
        %v1341 = vpop.f32.mrf.mxu0
        %1342 = vdwg.mxu0
        %v1343 = vmax.f32 %v1338, 0.0
        %v1344 = vpack.c.bf16 %v1343, %v1343
        %1345 = vst [vmem:[%s350] sm:$0xf] %v1344
        %s1346 = sand.u32 %s207, 1
        %s1347 = scalar_lea.sflag [#allocation4], %s1346
        %s1348 = sand.u32 %s207, 1
        %s1349 = smul.addr %s1348, 4
        %s1350 = scalar_lea.vmem [#allocation8], %s1349
        // Predicated region
        $region65: #{tpu_custom_call.1} parent=51 // pred_check
          %p1351 = pneg %p217
        $region66: #{tpu_custom_call.1} parent=51 // pred_check_branch
          %1353 = sbr.rel (%p1351) target = $region68
        $region67: #{tpu_custom_call.1} parent=51 // pred_region
          %s1355 = ssub.s32 64, 64
          %1356 = vsyncadd %s1347, %s1355
          %s1357 = smul.addr %s26, 64
          %s1358 = scalar_lea.hbm %s8, %s1357
          %s1360 = sshll.u32 %s1350, 4
          %s1361 = int_to_ptr.vmem [resolvable:$true] %s1360
          %1363 = dma.vmem_to_hbm [thread:$0]  %s1361, 64, %s1358, %s1347
        $region68: #{tpu_custom_call.1} parent=51 // pred_fallthru
          _
      $region52: #{tpu_custom_call.1} parent=5 // pred_fallthru
        _
      %p1364 = scmp.le.s32.totalorder 2, %s21
      // Predicated region
      $region69: #{tpu_custom_call.1} parent=5 // pred_check
        %p1365 = pneg %p1364
      $region70: #{tpu_custom_call.1} parent=5 // pred_check_branch
        %1367 = sbr.rel (%p1365) target = $region72
      $region71: #{tpu_custom_call.1} parent=5 // pred_region
        %s1368 = ssub.s32 %s21, 2
        // Predicated region
        $region73: #{tpu_custom_call.1} parent=71 // pred_check
          %p1369 = pneg %p223
        $region74: #{tpu_custom_call.1} parent=71 // pred_check_branch
          %1371 = sbr.rel (%p1369) target = $region76
        $region75: #{tpu_custom_call.1} parent=71 // pred_region
          %s1372 = sand.u32 %s208, 1
          %s1373 = scalar_lea.sflag [#allocation4], %s1372
          %s1374 = sand.u32 %s208, 1
          %s1375 = smul.addr %s1374, 4
          %s1376 = scalar_lea.vmem [#allocation8], %s1375
          %1377 = dma.done %s1373, 64
        $region76: #{tpu_custom_call.1} parent=71 // pred_fallthru
          _
      $region72: #{tpu_custom_call.1} parent=5 // pred_fallthru
        _
    $region6: #{tpu_custom_call.1} parent=1 // loop_footer
      %s25 = sadd.s32 1, %s21
    $region7: #{tpu_custom_call.1} parent=1 // loop_footer_branch
      %20 = sbr.rel target = $region3
    $region8: #{tpu_custom_call.1} parent=1 // loop_exit
      _
    %1378 = vsyncpa [#allocation3], 1
    %s1379 = scalar_lea.sflag [#allocation3], 1
    %1380 = vsyncpa %s1379, 1
    %1381 = vsyncpa [#allocation6], 1
    %1382 = vsyncpa [#allocation4], 1
    %s1383 = scalar_lea.sflag [#allocation4], 1
    %1384 = vsyncpa %s1383, 1

</llo_original>
